<compile_context>
chip_gen: v5e
topology: v5e:2x2
jax: 0.10.0
libtpu: 0.0.40
codegen_flags: <defaults>
</compile_context>

<pallas_src>
import jax
import jax.numpy as jnp
from jax.experimental import pallas as pl
from jax.experimental.pallas import tpu as pltpu


def _linear_relu_kernel(x_ref, w_ref, b_ref, o_ref):
    # x_ref : (tm, K)     activation tile (compute dtype, e.g. bf16)
    # w_ref : (1, K, tn)  block-contiguous weight slab (compute dtype)
    # b_ref : (1, tn)     bias tile (f32)
    # o_ref : (tm, tn)    output tile
    acc = jnp.dot(x_ref[...], w_ref[0], preferred_element_type=jnp.float32)
    acc = acc + b_ref[...]                      # f32 bias, broadcast over rows
    o_ref[...] = jnp.maximum(acc, 0.0).astype(o_ref.dtype)


def flatten_linear_relu(x_nchw, weight, bias, *, tn=256, tm=128,
                        compute_dtype=jnp.bfloat16):
    """Fused flatten -> Linear -> ReLU.

    x_nchw : (B, C, H, W)
    weight : (N, K) in PyTorch nn.Linear layout (out_features, in_features)
    bias   : (N,)
    """
    B = int(x_nchw.shape[0])
    K = int(x_nchw.shape[1] * x_nchw.shape[2] * x_nchw.shape[3])
    N, Kw = int(weight.shape[0]), int(weight.shape[1])
    assert Kw == K and bias.shape == (N,)

    out_dtype = x_nchw.dtype

    # torch.flatten(x, 1): row-major over (C, H, W) == jnp.reshape.
    x2d = x_nchw.reshape(B, K).astype(compute_dtype)

    # ---- N (output-feature) tiling ----
    tn = min(tn, N)
    assert N % tn == 0 and tn % 128 == 0, "out_features must tile by 128-aligned tn"
    n_tiles = N // tn

    # One-time weight pre-pack: (N, K) -> (N//tn, K, tn), block-contiguous
    # per grid step, streamed in compute_dtype (bf16).
    w_packed = (weight.astype(compute_dtype)
                      .reshape(n_tiles, tn, K)
                      .transpose(0, 2, 1))          # (n_tiles, K, tn)

    b2d = bias.reshape(1, N).astype(jnp.float32)

    # ---- batch (M) tiling ----
    if B <= tm:
        tm_eff = B            # single full-B block (full-dim layout exception)
        b_pad = B
    else:
        tm_eff = tm           # tm=128 is (8,*)-aligned
        b_pad = -(-B // tm_eff) * tm_eff
        if b_pad != B:
            x2d = jnp.pad(x2d, ((0, b_pad - B), (0, 0)))
    m_tiles = b_pad // tm_eff

    # ---- VMEM budget / cost estimate ----
    cs = jnp.dtype(compute_dtype).itemsize
    osz = jnp.dtype(out_dtype).itemsize
    # double-buffered x tile + weight slab + output tile, plus slack
    vmem_needed = 2 * (tm_eff * K * cs + K * tn * cs + tm_eff * tn * osz) + (1 << 20)
    vmem_limit = max(min(vmem_needed, 56 * 1024 * 1024), 32 * 1024 * 1024)

    cost = pl.CostEstimate(
        flops=2 * b_pad * K * N,
        bytes_accessed=K * N * cs + b_pad * K * cs + b_pad * N * osz + N * 4,
        transcendentals=0,
    )

    out = pl.pallas_call(
        _linear_relu_kernel,
        out_shape=jax.ShapeDtypeStruct((b_pad, N), out_dtype),
        grid_spec=pltpu.PrefetchScalarGridSpec(
            num_scalar_prefetch=0,
            grid=(m_tiles, n_tiles),
            in_specs=[
                pl.BlockSpec((tm_eff, K), lambda i, j: (i, 0)),     # activations
                pl.BlockSpec((1, K, tn), lambda i, j: (j, 0, 0)),   # packed weight slab
                pl.BlockSpec((1, tn), lambda i, j: (0, j)),         # bias tile
            ],
            out_specs=pl.BlockSpec((tm_eff, tn), lambda i, j: (i, j)),
        ),
        compiler_params=pltpu.CompilerParams(
            dimension_semantics=("parallel", "parallel"),
            vmem_limit_bytes=int(vmem_limit),
        ),
        cost_estimate=cost,
    )(x2d, w_packed, b2d)

    if b_pad != B:
        out = out[:B]
    return out


if __name__ == "__main__":
    # Small shapes consistent with the module's forward:
    #   flatten(NCHW, 1) -> Linear(in=C*H*W, out=N, bias=True) -> ReLU
    # (original module: C=512, H=W=7, in=25088, out=4096; scaled down here)
    B, C, H, W = 2, 32, 7, 7          # K = 1568
    K = C * H * W
    N = 512                           # out_features -> 2 column tiles of tn=256

    key = jax.random.PRNGKey(0)
    kx, kw, kb = jax.random.split(key, 3)

    x = jax.random.normal(kx, (B, C, H, W), dtype=jnp.float32)
    # PyTorch Linear stores weight as (out, in); emulate its uniform init range.
    bound = 1.0 / (K ** 0.5)
    w_torch = jax.random.uniform(kw, (N, K), minval=-bound, maxval=bound,
                                 dtype=jnp.float32)
    bias = jax.random.uniform(kb, (N,), minval=-bound, maxval=bound,
                              dtype=jnp.float32)

    out = flatten_linear_relu(x, w_torch, bias)
    out = jax.block_until_ready(out)

    # Reference in plain f32 JAX (kernel streams bf16 weights/activations with
    # f32 accumulation, so compare with a bf16-appropriate tolerance).
    ref = jnp.maximum(x.reshape(B, K) @ w_torch.T + bias, 0.0)
    assert out.shape == (B, N)
    assert jnp.allclose(out, ref, atol=2e-2, rtol=2e-2)

    print("KERNEL_OK")
</pallas_src>

<mosaic_0001>
module attributes {stable_mosaic.version = 11 : i64} {
  func.func @_linear_relu_kernel(%arg0: i32, %arg1: i32, %arg2: memref<2x1568xbf16, #tpu.memory_space<vmem>>, %arg3: memref<1x1568x256xbf16, #tpu.memory_space<vmem>>, %arg4: memref<1x256xf32, #tpu.memory_space<vmem>>, %arg5: memref<2x256xf32, #tpu.memory_space<vmem>>) attributes {dimension_semantics = [#tpu.dimension_semantics<parallel>, #tpu.dimension_semantics<parallel>], iteration_bounds = array<i64: 1, 2>, scalar_prefetch = 0 : i64, scratch_operands = 0 : i64, tpu.core_type = #tpu.core_type<tc>, window_params = [{transform_indices = @transform_0, window_bounds = array<i64: 2, 1568>}, {transform_indices = @transform_1, window_bounds = array<i64: 1, 1568, 256>}, {transform_indices = @transform_2, window_bounds = array<i64: 1, 256>}, {transform_indices = @transform_3, window_bounds = array<i64: 2, 256>}]} {
    %c0 = arith.constant 0 : index
    %c0_0 = arith.constant 0 : index
    %0 = vector.load %arg2[%c0, %c0_0] : memref<2x1568xbf16, #tpu.memory_space<vmem>>, vector<2x1568xbf16>
    %c0_1 = arith.constant 0 : index
    %c0_2 = arith.constant 0 : index
    %c0_3 = arith.constant 0 : index
    %1 = vector.load %arg3[%c0_1, %c0_2, %c0_3] : memref<1x1568x256xbf16, #tpu.memory_space<vmem>>, vector<1x1568x256xbf16>
    %2 = vector.shape_cast %1 : vector<1x1568x256xbf16> to vector<1568x256xbf16>
    %cst = arith.constant dense<0.000000e+00> : vector<2x256xf32>
    %3 = tpu.matmul %0, %2, %cst {dimension_numbers = #tpu.dot_dimension_numbers<[1], [0], [0], [1], [0, 0, 1, 1], [], []>} : vector<2x1568xbf16>, vector<1568x256xbf16>, vector<2x256xf32> -> vector<2x256xf32>
    %c0_4 = arith.constant 0 : index
    %c0_5 = arith.constant 0 : index
    %4 = vector.load %arg4[%c0_4, %c0_5] : memref<1x256xf32, #tpu.memory_space<vmem>>, vector<1x256xf32>
    %5 = vector.broadcast %4 : vector<1x256xf32> to vector<2x256xf32>
    %6 = arith.addf %3, %5 : vector<2x256xf32>
    %cst_6 = arith.constant 0.000000e+00 : f32
    %7 = vector.broadcast %cst_6 : f32 to vector<2x256xf32>
    %8 = arith.maximumf %6, %7 : vector<2x256xf32>
    %c0_7 = arith.constant 0 : index
    %c0_8 = arith.constant 0 : index
    %9 = vector.load %arg5[%c0_7, %c0_8] : memref<2x256xf32, #tpu.memory_space<vmem>>, vector<2x256xf32>
    tpu.vector_store %arg5[%c0_7, %c0_8], %8 {strides = array<i32>} : memref<2x256xf32, #tpu.memory_space<vmem>>, vector<2x256xf32>,
    return
  }
  func.func @transform_0(%arg0: i32, %arg1: i32) -> (i32, i32) {
    %c0_i32 = arith.constant 0 : i32
    %c0_i32_0 = arith.constant 0 : i32
    return %arg0, %c0_i32 : i32, i32
  }
  func.func @transform_1(%arg0: i32, %arg1: i32) -> (i32, i32, i32) {
    %c0_i32 = arith.constant 0 : i32
    %c0_i32_0 = arith.constant 0 : i32
    %c0_i32_1 = arith.constant 0 : i32
    return %arg1, %c0_i32, %c0_i32_0 : i32, i32, i32
  }
  func.func @transform_2(%arg0: i32, %arg1: i32) -> (i32, i32) {
    %c0_i32 = arith.constant 0 : i32
    %c0_i32_0 = arith.constant 0 : i32
    return %c0_i32, %arg1 : i32, i32
  }
  func.func @transform_3(%arg0: i32, %arg1: i32) -> (i32, i32) {
    %c0_i32 = arith.constant 0 : i32
    return %arg0, %arg1 : i32, i32
  }
}

</mosaic_0001>

<llo_original>
// kernel: tpu_custom_call.1
$region0: #{tpu_custom_call.1}
  #allocation0 [shape = 'u32[]', space=smem, size = 0x4, offset = 0x4, fixed_abs, tag = 'smem constant byte address 0x4 - core index']
  #allocation1 [shape = 'u32[72,128]{1,0:T(1,128)}', space=vmem, size = 0x9000, scoped, tag = 'internal scratch']
  %s0 = inlined_call_operand.hbm [shape: bf16[2,1568], index: 0, kind: input, shape index: {}]
  %s1 = inlined_call_operand.hbm [shape: bf16[2,1568,256], index: 1, kind: input, shape index: {}]
  %s2 = inlined_call_operand.hbm [shape: f32[1,512], index: 2, kind: input, shape index: {}]
  %s3 = inlined_call_operand.hbm [shape: f32[2,512], index: 3, kind: output, shape index: {}]
  %s4 = sld [smem:[#allocation0]]
  $region57: #{tpu_custom_call.1} parent=0
    _
  %s6 = ssub.s32 1, %s4
  %s7 = scalar_select 0, %s6, %s4
  $region1: #{tpu_custom_call.1} parent=0
    #allocation2 [shape = 'u8[6656]{0}', space=vmem, size = 0x1c00, scoped, tag = 'input window, operand 0, single buffered']
    #allocation3 [shape = 's32[2]{0}', space=sflag, size = 0x8, scoped, tag = 'scoped memory for tpu_custom_call.1']
    #allocation4 [shape = 's32[2]{0}', space=sflag, size = 0x8, scoped, tag = 'scoped memory for tpu_custom_call.1']
    #allocation5 [shape = 'u8[1605632]{0}', space=vmem, size = 0x188000, scoped, tag = 'input window, operand 1']
    #allocation6 [shape = 's32[2]{0}', space=sflag, size = 0x8, scoped, tag = 'scoped memory for tpu_custom_call.1']
    #allocation7 [shape = 'u8[2048]{0}', space=vmem, size = 0x800, scoped, tag = 'input window, operand 2']
    #allocation8 [shape = 'u8[4096]{0}', space=vmem, size = 0x1000, scoped, tag = 'output window, operand 0']
    %8 = vsyncpa [#allocation3], 0
    %9 = vsyncpa [#allocation6], 0
    %s10 = scalar_lea.sflag [#allocation6], 1
    %11 = vsyncpa %s10, 0
    %12 = vsyncpa [#allocation4], 0
    %s13 = scalar_lea.sflag [#allocation4], 1
    %14 = vsyncpa %s13, 0
    loop: start=0, step=1, limit=4
    $region2: #{tpu_custom_call.1} parent=1 // loop_pre_header
      _
    $region3: #{tpu_custom_call.1} parent=1 // loop_header
      %s16 = sphi 0, %s20
      %p17 = scmp.ge.s32.totalorder %s16, 4
      %s23 = sphi 0, %s35
      %s24 = sphi 0, %s31
      %s25 = sphi 0, %s23
      %s26 = sphi 0, %s24
      %s27 = sphi 0, %s25
      %s28 = sphi 0, %s26
      %s38 = sphi 0, %s40
      %s41 = sphi 0, %s38
      %s42 = sphi 0, %s41
      %s58 = sphi 0, %s42
      %s64 = sphi 0, %s66
      %s67 = sphi 0, %s64
      %s68 = sphi 0, %s67
      %s84 = sphi 0, %s68
      %s90 = sphi 0, %s92
      %s93 = sphi 0, %s90
      %s94 = sphi 0, %s93
      %s110 = sphi 0, %s94
      %s118 = sphi 0, %s120
      %s121 = sphi 0, %s118
      %s122 = sphi 0, %s121
      %s138 = sphi 0, %s122
    $region4: #{tpu_custom_call.1} parent=1 // loop_header_branch
      %19 = sbr.rel (%p17) target = $region8
    $region5: #{tpu_custom_call.1} parent=1 // loop_body
      %s21 = ssub.s32 %s16, 1
      %s22 = ssub.s32 %s16, 2
      %s29 = sadd.s32 1, %s24
      %p30 = scmp.ge.s32.totalorder %s29, 2
      %s31 = scalar_select %p30, 0, %s29
      %s32 = sadd.s32 1, %s23
      %s33 = scalar_select %p30, %s32, %s23
      %p34 = scmp.ge.s32.totalorder %s33, 1
      %s35 = scalar_select %p34, 0, %s33
      %s36 = ssub.s32 %s23, %s35
      %p37 = scmp.eq.s32.totalorder %s36, 0
      %s39 = sadd.s32 %s38, 1
      %s40 = scalar_select %p37, %s38, %s39
      %p43 = pneg %p37
      %p44 = scmp.eq.s32.totalorder %s16, 1
      %p45 = por %p43, %p44
      %p46 = scmp.ne.s32.totalorder %s38, %s41
      %p47 = scmp.eq.s32.totalorder %s16, 0
      %p48 = por %p46, %p47
      %p49 = scmp.ne.s32.totalorder %s38, %s41
      %p50 = scmp.eq.s32.totalorder %s21, 1
      %p51 = por %p49, %p50
      %p52 = scmp.ne.s32.totalorder %s41, %s42
      %p53 = scmp.eq.s32.totalorder %s21, 0
      %p54 = por %p52, %p53
      %p55 = scmp.ne.s32.totalorder %s41, %s42
      %p56 = scmp.eq.s32.totalorder %s22, 1
      %p57 = por %p55, %p56
      %p59 = scmp.ne.s32.totalorder %s42, %s58
      %p60 = scmp.eq.s32.totalorder %s22, 0
      %p61 = por %p59, %p60
      %s62 = ssub.s32 %s24, %s31
      %p63 = scmp.eq.s32.totalorder %s62, 0
      %s65 = sadd.s32 %s64, 1
      %s66 = scalar_select %p63, %s64, %s65
      %p69 = pneg %p63
      %p70 = scmp.eq.s32.totalorder %s16, 1
      %p71 = por %p69, %p70
      %p72 = scmp.ne.s32.totalorder %s64, %s67
      %p73 = scmp.eq.s32.totalorder %s16, 0
      %p74 = por %p72, %p73
      %p75 = scmp.ne.s32.totalorder %s64, %s67
      %p76 = scmp.eq.s32.totalorder %s21, 1
      %p77 = por %p75, %p76
      %p78 = scmp.ne.s32.totalorder %s67, %s68
      %p79 = scmp.eq.s32.totalorder %s21, 0
      %p80 = por %p78, %p79
      %p81 = scmp.ne.s32.totalorder %s67, %s68
      %p82 = scmp.eq.s32.totalorder %s22, 1
      %p83 = por %p81, %p82
      %p85 = scmp.ne.s32.totalorder %s68, %s84
      %p86 = scmp.eq.s32.totalorder %s22, 0
      %p87 = por %p85, %p86
      %s88 = ssub.s32 %s24, %s31
      %p89 = scmp.eq.s32.totalorder %s88, 0
      %s91 = sadd.s32 %s90, 1
      %s92 = scalar_select %p89, %s90, %s91
      %p95 = pneg %p89
      %p96 = scmp.eq.s32.totalorder %s16, 1
      %p97 = por %p95, %p96
      %p98 = scmp.ne.s32.totalorder %s90, %s93
      %p99 = scmp.eq.s32.totalorder %s16, 0
      %p100 = por %p98, %p99
      %p101 = scmp.ne.s32.totalorder %s90, %s93
      %p102 = scmp.eq.s32.totalorder %s21, 1
      %p103 = por %p101, %p102
      %p104 = scmp.ne.s32.totalorder %s93, %s94
      %p105 = scmp.eq.s32.totalorder %s21, 0
      %p106 = por %p104, %p105
      %p107 = scmp.ne.s32.totalorder %s93, %s94
      %p108 = scmp.eq.s32.totalorder %s22, 1
      %p109 = por %p107, %p108
      %p111 = scmp.ne.s32.totalorder %s94, %s110
      %p112 = scmp.eq.s32.totalorder %s22, 0
      %p113 = por %p111, %p112
      %s114 = ssub.s32 %s23, %s35
      %s115 = ssub.s32 %s24, %s31
      %s116 = sor.u32 %s114, %s115
      %p117 = scmp.eq.s32.totalorder %s116, 0
      %s119 = sadd.s32 %s118, 1
      %s120 = scalar_select %p117, %s118, %s119
      %p123 = pneg %p117
      %p124 = scmp.eq.s32.totalorder %s16, 1
      %p125 = por %p123, %p124
      %p126 = scmp.ne.s32.totalorder %s118, %s121
      %p127 = scmp.eq.s32.totalorder %s16, 0
      %p128 = por %p126, %p127
      %p129 = scmp.ne.s32.totalorder %s118, %s121
      %p130 = scmp.eq.s32.totalorder %s21, 1
      %p131 = por %p129, %p130
      %p132 = scmp.ne.s32.totalorder %s121, %s122
      %p133 = scmp.eq.s32.totalorder %s21, 0
      %p134 = por %p132, %p133
      %p135 = scmp.ne.s32.totalorder %s121, %s122
      %p136 = scmp.eq.s32.totalorder %s22, 1
      %p137 = por %p135, %p136
      %p139 = scmp.ne.s32.totalorder %s122, %s138
      %p140 = scmp.eq.s32.totalorder %s22, 0
      %p141 = por %p139, %p140
      %p142 = scmp.le.s32.totalorder 1, %s16
      %p143 = scmp.lt.s32.totalorder %s16, 3
      %p144 = pnand %p142, %p143
      %p145 = pneg %p144
      // Predicated region
      $region9: #{tpu_custom_call.1} parent=5 // pred_check
        _
      $region10: #{tpu_custom_call.1} parent=5 // pred_check_branch
        %147 = sbr.rel (%p144) target = $region12
      $region11: #{tpu_custom_call.1} parent=5 // pred_region
        %s148 = ssub.s32 %s16, 1
        // Predicated region
        $region13: #{tpu_custom_call.1} parent=11 // pred_check
          %p149 = pneg %p54
        $region14: #{tpu_custom_call.1} parent=11 // pred_check_branch
          %151 = sbr.rel (%p149) target = $region16
        $region15: #{tpu_custom_call.1} parent=11 // pred_region
          %153 = vsyncadd [#allocation3], 0
          %s154 = smul.addr %s25, 13
          %s155 = scalar_lea.hbm %s0, %s154
          %s157 = sshll.u32 %s155, 4
          %s158 = int_to_ptr.hbm [resolvable:$true] %s157
          %s159 = sshll.u32 [#allocation2], 4
          %s160 = int_to_ptr.vmem [resolvable:$true] %s159
          %162 = dma.hbm_to_vmem [thread:$0]  %s158, 208, %s160, [#allocation3]
        $region16: #{tpu_custom_call.1} parent=11 // pred_fallthru
          _
      $region12: #{tpu_custom_call.1} parent=5 // pred_fallthru
        _
      %p163 = scmp.lt.s32.totalorder %s16, 2
      // Predicated region
      $region17: #{tpu_custom_call.1} parent=5 // pred_check
        %p164 = pneg %p163
      $region18: #{tpu_custom_call.1} parent=5 // pred_check_branch
        %166 = sbr.rel (%p164) target = $region20
      $region19: #{tpu_custom_call.1} parent=5 // pred_region
        // Predicated region
        $region21: #{tpu_custom_call.1} parent=19 // pred_check
          %p167 = pneg %p74
        $region22: #{tpu_custom_call.1} parent=19 // pred_check_branch
          %169 = sbr.rel (%p167) target = $region24
        $region23: #{tpu_custom_call.1} parent=19 // pred_region
          %s170 = sand.u32 %s16, 1
          %s171 = scalar_lea.sflag [#allocation6], %s170
          %s172 = sand.u32 %s64, 1
          %s173 = smul.addr %s172, 1568
          %s174 = scalar_lea.vmem [#allocation5], %s173
          %176 = vsyncadd %s171, 0
          %s177 = smul.addr %s24, 392
          %s178 = smul.addr %s177, 4
          %s179 = scalar_lea.hbm %s1, %s178
          %s180 = sshll.u32 %s179, 4
          %s181 = int_to_ptr.hbm [resolvable:$true] %s180
          %s182 = sshll.u32 %s174, 4
          %s183 = int_to_ptr.vmem [resolvable:$true] %s182
          %188 = dma.hbm_to_vmem [thread:$0]  %s181, 25088, %s183, %s171, 128, 128, 8
        $region24: #{tpu_custom_call.1} parent=19 // pred_fallthru
          _
        // Predicated region
        $region25: #{tpu_custom_call.1} parent=19 // pred_check
          %p189 = pneg %p100
        $region26: #{tpu_custom_call.1} parent=19 // pred_check_branch
          %191 = sbr.rel (%p189) target = $region28
        $region27: #{tpu_custom_call.1} parent=19 // pred_region
          %s192 = sand.u32 %s16, 1
          %s193 = scalar_lea.sflag [#allocation6], %s192
          %s194 = sand.u32 %s90, 1
          %s195 = smul.addr %s194, 2
          %s196 = scalar_lea.vmem [#allocation7], %s195
          %s197 = smul.u32 2, %s24
          %199 = vsyncadd %s193, 0
          %s200 = scalar_lea.hbm %s2, %s197
          %s202 = sshll.u32 %s200, 4
          %s203 = int_to_ptr.hbm [resolvable:$true] %s202
          %s204 = sshll.u32 %s196, 4
          %s205 = int_to_ptr.vmem [resolvable:$true] %s204
          %207 = dma.hbm_to_vmem [thread:$0]  %s203, 32, %s205, %s193
        $region28: #{tpu_custom_call.1} parent=19 // pred_fallthru
          _
      $region20: #{tpu_custom_call.1} parent=5 // pred_fallthru
        _
      %p208 = scmp.le.s32.totalorder 1, %s16
      %p209 = scmp.lt.s32.totalorder %s16, 3
      %p210 = pnand %p208, %p209
      %p211 = pneg %p210
      // Predicated region
      $region29: #{tpu_custom_call.1} parent=5 // pred_check
        _
      $region30: #{tpu_custom_call.1} parent=5 // pred_check_branch
        %213 = sbr.rel (%p210) target = $region32
      $region31: #{tpu_custom_call.1} parent=5 // pred_region
        %s214 = ssub.s32 %s16, 1
        // Predicated region
        $region33: #{tpu_custom_call.1} parent=31 // pred_check
          %p215 = pneg %p54
        $region34: #{tpu_custom_call.1} parent=31 // pred_check_branch
          %217 = sbr.rel (%p215) target = $region36
        $region35: #{tpu_custom_call.1} parent=31 // pred_region
          %219 = dma.done [#allocation3], 208
        $region36: #{tpu_custom_call.1} parent=31 // pred_fallthru
          _
        %s220 = sand.u32 %s21, 1
        %s221 = scalar_lea.sflag [#allocation6], %s220
        %s222 = sand.u32 %s67, 1
        %s223 = smul.addr %s222, 1568
        %s224 = scalar_lea.vmem [#allocation5], %s223
        // Predicated region
        $region37: #{tpu_custom_call.1} parent=31 // pred_check
          %p225 = pneg %p80
        $region38: #{tpu_custom_call.1} parent=31 // pred_check_branch
          %227 = sbr.rel (%p225) target = $region40
        $region39: #{tpu_custom_call.1} parent=31 // pred_region
          %229 = dma.done %s221, 25088
        $region40: #{tpu_custom_call.1} parent=31 // pred_fallthru
          _
        %s230 = sand.u32 %s21, 1
        %s231 = scalar_lea.sflag [#allocation6], %s230
        %s232 = sand.u32 %s93, 1
        %s233 = smul.addr %s232, 2
        %s234 = scalar_lea.vmem [#allocation7], %s233
        // Predicated region
        $region41: #{tpu_custom_call.1} parent=31 // pred_check
          %p235 = pneg %p106
        $region42: #{tpu_custom_call.1} parent=31 // pred_check_branch
          %237 = sbr.rel (%p235) target = $region44
        $region43: #{tpu_custom_call.1} parent=31 // pred_region
          %239 = dma.done %s231, 32
        $region44: #{tpu_custom_call.1} parent=31 // pred_fallthru
          _
        %p240 = pneg %p54
        %p241 = pneg %p51
        %s242 = sand.u32 %s21, 1
        %s243 = scalar_lea.sflag [#allocation6], %s242
        %s244 = sand.u32 %s67, 1
        %s245 = smul.addr %s244, 1568
        %s246 = scalar_lea.vmem [#allocation5], %s245
        %p247 = pneg %p80
        %p248 = pneg %p77
        %s249 = sand.u32 %s21, 1
        %s250 = scalar_lea.sflag [#allocation6], %s249
        %s251 = sand.u32 %s93, 1
        %s252 = smul.addr %s251, 2
        %s253 = scalar_lea.vmem [#allocation7], %s252
        %p254 = pneg %p106
        %p255 = pneg %p103
        %p256 = pneg %p134
        %p257 = pneg %p131
        %s258 = sand.u32 %s121, 1
        %s259 = scalar_lea.sflag [#allocation4], %s258
        %s260 = sand.u32 %s121, 1
        %s261 = smul.addr %s260, 4
        %s262 = scalar_lea.vmem [#allocation8], %s261
        %s263 = smul.u32 2, %s26
        %s264 = smul.u32 2, %s26
        %v266 = vld [vmem:[#allocation2] sm:$0xff]
        %v267 = vld [vmem:[#allocation2 + $0x8] sm:$0x1f]
        %v268 = vld [vmem:[%s224] sm:$0xff]
        %v269 = vld [vmem:[%s224 + $0x8] sm:$0xff]
        %v270 = vld [vmem:[%s224 + $0x10] sm:$0xff]
        %v271 = vld [vmem:[%s224 + $0x18] sm:$0xff]
        %v272 = vld [vmem:[%s224 + $0x20] sm:$0xff]
        %v273 = vld [vmem:[%s224 + $0x28] sm:$0xff]
        %v274 = vld [vmem:[%s224 + $0x30] sm:$0xff]
        %v275 = vld [vmem:[%s224 + $0x38] sm:$0xff]
        %v276 = vld [vmem:[%s224 + $0x40] sm:$0xff]
        %v277 = vld [vmem:[%s224 + $0x48] sm:$0xff]
        %v278 = vld [vmem:[%s224 + $0x50] sm:$0xff]
        %v279 = vld [vmem:[%s224 + $0x58] sm:$0xff]
        %v280 = vld [vmem:[%s224 + $0x60] sm:$0xff]
        %v281 = vld [vmem:[%s224 + $0x68] sm:$0xff]
        %v282 = vld [vmem:[%s224 + $0x70] sm:$0xff]
        %v283 = vld [vmem:[%s224 + $0x78] sm:$0xff]
        %v284 = vld [vmem:[%s224 + $0x80] sm:$0xff]
        %v285 = vld [vmem:[%s224 + $0x88] sm:$0xff]
        %v286 = vld [vmem:[%s224 + $0x90] sm:$0xff]
        %v287 = vld [vmem:[%s224 + $0x98] sm:$0xff]
        %v288 = vld [vmem:[%s224 + $0xa0] sm:$0xff]
        %v289 = vld [vmem:[%s224 + $0xa8] sm:$0xff]
        %v290 = vld [vmem:[%s224 + $0xb0] sm:$0xff]
        %v291 = vld [vmem:[%s224 + $0xb8] sm:$0xff]
        %v292 = vld [vmem:[%s224 + $0xc0] sm:$0xff]
        %v293 = vld [vmem:[%s224 + $0xc8] sm:$0xff]
        %v294 = vld [vmem:[%s224 + $0xd0] sm:$0xff]
        %v295 = vld [vmem:[%s224 + $0xd8] sm:$0xff]
        %v296 = vld [vmem:[%s224 + $0xe0] sm:$0xff]
        %v297 = vld [vmem:[%s224 + $0xe8] sm:$0xff]
        %v298 = vld [vmem:[%s224 + $0xf0] sm:$0xff]
        %v299 = vld [vmem:[%s224 + $0xf8] sm:$0xff]
        %v300 = vld [vmem:[%s224 + $0x100] sm:$0xff]
        %v301 = vld [vmem:[%s224 + $0x108] sm:$0xff]
        %v302 = vld [vmem:[%s224 + $0x110] sm:$0xff]
        %v303 = vld [vmem:[%s224 + $0x118] sm:$0xff]
        %v304 = vld [vmem:[%s224 + $0x120] sm:$0xff]
        %v305 = vld [vmem:[%s224 + $0x128] sm:$0xff]
        %v306 = vld [vmem:[%s224 + $0x130] sm:$0xff]
        %v307 = vld [vmem:[%s224 + $0x138] sm:$0xff]
        %v308 = vld [vmem:[%s224 + $0x140] sm:$0xff]
        %v309 = vld [vmem:[%s224 + $0x148] sm:$0xff]
        %v310 = vld [vmem:[%s224 + $0x150] sm:$0xff]
        %v311 = vld [vmem:[%s224 + $0x158] sm:$0xff]
        %v312 = vld [vmem:[%s224 + $0x160] sm:$0xff]
        %v313 = vld [vmem:[%s224 + $0x168] sm:$0xff]
        %v314 = vld [vmem:[%s224 + $0x170] sm:$0xff]
        %v315 = vld [vmem:[%s224 + $0x178] sm:$0xff]
        %v316 = vld [vmem:[%s224 + $0x180] sm:$0xff]
        %v317 = vld [vmem:[%s224 + $0x188] sm:$0xff]
        %v318 = vld [vmem:[%s224 + $0x190] sm:$0xff]
        %v319 = vld [vmem:[%s224 + $0x198] sm:$0xff]
        %v320 = vld [vmem:[%s224 + $0x1a0] sm:$0xff]
        %v321 = vld [vmem:[%s224 + $0x1a8] sm:$0xff]
        %v322 = vld [vmem:[%s224 + $0x1b0] sm:$0xff]
        %v323 = vld [vmem:[%s224 + $0x1b8] sm:$0xff]
        %v324 = vld [vmem:[%s224 + $0x1c0] sm:$0xff]
        %v325 = vld [vmem:[%s224 + $0x1c8] sm:$0xff]
        %v326 = vld [vmem:[%s224 + $0x1d0] sm:$0xff]
        %v327 = vld [vmem:[%s224 + $0x1d8] sm:$0xff]
        %v328 = vld [vmem:[%s224 + $0x1e0] sm:$0xff]
        %v329 = vld [vmem:[%s224 + $0x1e8] sm:$0xff]
        %v330 = vld [vmem:[%s224 + $0x1f0] sm:$0xff]
        %v331 = vld [vmem:[%s224 + $0x1f8] sm:$0xff]
        %v332 = vld [vmem:[%s224 + $0x200] sm:$0xff]
        %v333 = vld [vmem:[%s224 + $0x208] sm:$0xff]
        %v334 = vld [vmem:[%s224 + $0x210] sm:$0xff]
        %v335 = vld [vmem:[%s224 + $0x218] sm:$0xff]
        %v336 = vld [vmem:[%s224 + $0x220] sm:$0xff]
        %v337 = vld [vmem:[%s224 + $0x228] sm:$0xff]
        %v338 = vld [vmem:[%s224 + $0x230] sm:$0xff]
        %v339 = vld [vmem:[%s224 + $0x238] sm:$0xff]
        %v340 = vld [vmem:[%s224 + $0x240] sm:$0xff]
        %v341 = vld [vmem:[%s224 + $0x248] sm:$0xff]
        %v342 = vld [vmem:[%s224 + $0x250] sm:$0xff]
        %v343 = vld [vmem:[%s224 + $0x258] sm:$0xff]
        %v344 = vld [vmem:[%s224 + $0x260] sm:$0xff]
        %v345 = vld [vmem:[%s224 + $0x268] sm:$0xff]
        %v346 = vld [vmem:[%s224 + $0x270] sm:$0xff]
        %v347 = vld [vmem:[%s224 + $0x278] sm:$0xff]
        %v348 = vld [vmem:[%s224 + $0x280] sm:$0xff]
        %v349 = vld [vmem:[%s224 + $0x288] sm:$0xff]
        %v350 = vld [vmem:[%s224 + $0x290] sm:$0xff]
        %v351 = vld [vmem:[%s224 + $0x298] sm:$0xff]
        %v352 = vld [vmem:[%s224 + $0x2a0] sm:$0xff]
        %v353 = vld [vmem:[%s224 + $0x2a8] sm:$0xff]
        %v354 = vld [vmem:[%s224 + $0x2b0] sm:$0xff]
        %v355 = vld [vmem:[%s224 + $0x2b8] sm:$0xff]
        %v356 = vld [vmem:[%s224 + $0x2c0] sm:$0xff]
        %v357 = vld [vmem:[%s224 + $0x2c8] sm:$0xff]
        %v358 = vld [vmem:[%s224 + $0x2d0] sm:$0xff]
        %v359 = vld [vmem:[%s224 + $0x2d8] sm:$0xff]
        %v360 = vld [vmem:[%s224 + $0x2e0] sm:$0xff]
        %v361 = vld [vmem:[%s224 + $0x2e8] sm:$0xff]
        %v362 = vld [vmem:[%s224 + $0x2f0] sm:$0xff]
        %v363 = vld [vmem:[%s224 + $0x2f8] sm:$0xff]
        %v364 = vld [vmem:[%s224 + $0x300] sm:$0xff]
        %v365 = vld [vmem:[%s224 + $0x308] sm:$0xff]
        %v366 = vld [vmem:[%s224 + $0x310] sm:$0xff]
        %v367 = vld [vmem:[%s224 + $0x318] sm:$0xff]
        %v368 = vld [vmem:[%s224 + $0x320] sm:$0xff]
        %v369 = vld [vmem:[%s224 + $0x328] sm:$0xff]
        %v370 = vld [vmem:[%s224 + $0x330] sm:$0xff]
        %v371 = vld [vmem:[%s224 + $0x338] sm:$0xff]
        %v372 = vld [vmem:[%s224 + $0x340] sm:$0xff]
        %v373 = vld [vmem:[%s224 + $0x348] sm:$0xff]
        %v374 = vld [vmem:[%s224 + $0x350] sm:$0xff]
        %v375 = vld [vmem:[%s224 + $0x358] sm:$0xff]
        %v376 = vld [vmem:[%s224 + $0x360] sm:$0xff]
        %v377 = vld [vmem:[%s224 + $0x368] sm:$0xff]
        %v378 = vld [vmem:[%s224 + $0x370] sm:$0xff]
        %v379 = vld [vmem:[%s224 + $0x378] sm:$0xff]
        %v380 = vld [vmem:[%s224 + $0x380] sm:$0xff]
        %v381 = vld [vmem:[%s224 + $0x388] sm:$0xff]
        %v382 = vld [vmem:[%s224 + $0x390] sm:$0xff]
        %v383 = vld [vmem:[%s224 + $0x398] sm:$0xff]
        %v384 = vld [vmem:[%s224 + $0x3a0] sm:$0xff]
        %v385 = vld [vmem:[%s224 + $0x3a8] sm:$0xff]
        %v386 = vld [vmem:[%s224 + $0x3b0] sm:$0xff]
        %v387 = vld [vmem:[%s224 + $0x3b8] sm:$0xff]
        %v388 = vld [vmem:[%s224 + $0x3c0] sm:$0xff]
        %v389 = vld [vmem:[%s224 + $0x3c8] sm:$0xff]
        %v390 = vld [vmem:[%s224 + $0x3d0] sm:$0xff]
        %v391 = vld [vmem:[%s224 + $0x3d8] sm:$0xff]
        %v392 = vld [vmem:[%s224 + $0x3e0] sm:$0xff]
        %v393 = vld [vmem:[%s224 + $0x3e8] sm:$0xff]
        %v394 = vld [vmem:[%s224 + $0x3f0] sm:$0xff]
        %v395 = vld [vmem:[%s224 + $0x3f8] sm:$0xff]
        %v396 = vld [vmem:[%s224 + $0x400] sm:$0xff]
        %v397 = vld [vmem:[%s224 + $0x408] sm:$0xff]
        %v398 = vld [vmem:[%s224 + $0x410] sm:$0xff]
        %v399 = vld [vmem:[%s224 + $0x418] sm:$0xff]
        %v400 = vld [vmem:[%s224 + $0x420] sm:$0xff]
        %v401 = vld [vmem:[%s224 + $0x428] sm:$0xff]
        %v402 = vld [vmem:[%s224 + $0x430] sm:$0xff]
        %v403 = vld [vmem:[%s224 + $0x438] sm:$0xff]
        %v404 = vld [vmem:[%s224 + $0x440] sm:$0xff]
        %v405 = vld [vmem:[%s224 + $0x448] sm:$0xff]
        %v406 = vld [vmem:[%s224 + $0x450] sm:$0xff]
        %v407 = vld [vmem:[%s224 + $0x458] sm:$0xff]
        %v408 = vld [vmem:[%s224 + $0x460] sm:$0xff]
        %v409 = vld [vmem:[%s224 + $0x468] sm:$0xff]
        %v410 = vld [vmem:[%s224 + $0x470] sm:$0xff]
        %v411 = vld [vmem:[%s224 + $0x478] sm:$0xff]
        %v412 = vld [vmem:[%s224 + $0x480] sm:$0xff]
        %v413 = vld [vmem:[%s224 + $0x488] sm:$0xff]
        %v414 = vld [vmem:[%s224 + $0x490] sm:$0xff]
        %v415 = vld [vmem:[%s224 + $0x498] sm:$0xff]
        %v416 = vld [vmem:[%s224 + $0x4a0] sm:$0xff]
        %v417 = vld [vmem:[%s224 + $0x4a8] sm:$0xff]
        %v418 = vld [vmem:[%s224 + $0x4b0] sm:$0xff]
        %v419 = vld [vmem:[%s224 + $0x4b8] sm:$0xff]
        %v420 = vld [vmem:[%s224 + $0x4c0] sm:$0xff]
        %v421 = vld [vmem:[%s224 + $0x4c8] sm:$0xff]
        %v422 = vld [vmem:[%s224 + $0x4d0] sm:$0xff]
        %v423 = vld [vmem:[%s224 + $0x4d8] sm:$0xff]
        %v424 = vld [vmem:[%s224 + $0x4e0] sm:$0xff]
        %v425 = vld [vmem:[%s224 + $0x4e8] sm:$0xff]
        %v426 = vld [vmem:[%s224 + $0x4f0] sm:$0xff]
        %v427 = vld [vmem:[%s224 + $0x4f8] sm:$0xff]
        %v428 = vld [vmem:[%s224 + $0x500] sm:$0xff]
        %v429 = vld [vmem:[%s224 + $0x508] sm:$0xff]
        %v430 = vld [vmem:[%s224 + $0x510] sm:$0xff]
        %v431 = vld [vmem:[%s224 + $0x518] sm:$0xff]
        %v432 = vld [vmem:[%s224 + $0x520] sm:$0xff]
        %v433 = vld [vmem:[%s224 + $0x528] sm:$0xff]
        %v434 = vld [vmem:[%s224 + $0x530] sm:$0xff]
        %v435 = vld [vmem:[%s224 + $0x538] sm:$0xff]
        %v436 = vld [vmem:[%s224 + $0x540] sm:$0xff]
        %v437 = vld [vmem:[%s224 + $0x548] sm:$0xff]
        %v438 = vld [vmem:[%s224 + $0x550] sm:$0xff]
        %v439 = vld [vmem:[%s224 + $0x558] sm:$0xff]
        %v440 = vld [vmem:[%s224 + $0x560] sm:$0xff]
        %v441 = vld [vmem:[%s224 + $0x568] sm:$0xff]
        %v442 = vld [vmem:[%s224 + $0x570] sm:$0xff]
        %v443 = vld [vmem:[%s224 + $0x578] sm:$0xff]
        %v444 = vld [vmem:[%s224 + $0x580] sm:$0xff]
        %v445 = vld [vmem:[%s224 + $0x588] sm:$0xff]
        %v446 = vld [vmem:[%s224 + $0x590] sm:$0xff]
        %v447 = vld [vmem:[%s224 + $0x598] sm:$0xff]
        %v448 = vld [vmem:[%s224 + $0x5a0] sm:$0xff]
        %v449 = vld [vmem:[%s224 + $0x5a8] sm:$0xff]
        %v450 = vld [vmem:[%s224 + $0x5b0] sm:$0xff]
        %v451 = vld [vmem:[%s224 + $0x5b8] sm:$0xff]
        %v452 = vld [vmem:[%s224 + $0x5c0] sm:$0xff]
        %v453 = vld [vmem:[%s224 + $0x5c8] sm:$0xff]
        %v454 = vld [vmem:[%s224 + $0x5d0] sm:$0xff]
        %v455 = vld [vmem:[%s224 + $0x5d8] sm:$0xff]
        %v456 = vld [vmem:[%s224 + $0x5e0] sm:$0xff]
        %v457 = vld [vmem:[%s224 + $0x5e8] sm:$0xff]
        %v458 = vld [vmem:[%s224 + $0x5f0] sm:$0xff]
        %v459 = vld [vmem:[%s224 + $0x5f8] sm:$0xff]
        %v460 = vld [vmem:[%s224 + $0x600] sm:$0xff]
        %v461 = vld [vmem:[%s224 + $0x608] sm:$0xff]
        %v462 = vld [vmem:[%s224 + $0x610] sm:$0xff]
        %v463 = vld [vmem:[%s224 + $0x618] sm:$0xff]
        %v464 = vld [vmem:[%s234] sm:$0x3]
        %v466 = vperm.slane %v464, 0
        %v467 = vperm.slane %v464, 1
        %471 = vst [vmem:[#allocation1] ss:$9 sm:$0xff] %v266
        %v472 = vld [vmem:[#allocation1] sm:$0xff]
        %v473 = vld [vmem:[#allocation1 + $0x9] sm:$0xff]
        %v474 = vld [vmem:[#allocation1 + $0x12] sm:$0xff]
        %v475 = vld [vmem:[#allocation1 + $0x1b] sm:$0xff]
        %v476 = vld [vmem:[#allocation1 + $0x24] sm:$0xff]
        %v477 = vld [vmem:[#allocation1 + $0x2d] sm:$0xff]
        %v478 = vld [vmem:[#allocation1 + $0x36] sm:$0xff]
        %v479 = vld [vmem:[#allocation1 + $0x3f] sm:$0xff]
        %481 = vst [vmem:[#allocation1] ss:$9 sm:$0xff] %v267
        %v482 = vld [vmem:[#allocation1] sm:$0xff]
        %v483 = vld [vmem:[#allocation1 + $0x9] sm:$0xff]
        %v484 = vld [vmem:[#allocation1 + $0x12] sm:$0xff]
        %v485 = vld [vmem:[#allocation1 + $0x1b] sm:$0xff]
        %v486 = vld [vmem:[#allocation1 + $0x24] sm:$0xff]
        %v695 = vunpack.c.l.b16 %v268
        %v696 = vunpack.c.h.b16 %v268
        %v697 = vunpack.c.l.b16 %v269
        %v698 = vunpack.c.h.b16 %v269
        %v699 = vunpack.c.l.b16 %v270
        %v700 = vunpack.c.h.b16 %v270
        %v701 = vunpack.c.l.b16 %v271
        %v702 = vunpack.c.h.b16 %v271
        %v703 = vunpack.c.l.b16 %v272
        %v704 = vunpack.c.h.b16 %v272
        %v705 = vunpack.c.l.b16 %v273
        %v706 = vunpack.c.h.b16 %v273
        %v707 = vunpack.c.l.b16 %v274
        %v708 = vunpack.c.h.b16 %v274
        %v709 = vunpack.c.l.b16 %v275
        %v710 = vunpack.c.h.b16 %v275
        %v711 = vunpack.c.l.b16 %v276
        %v712 = vunpack.c.h.b16 %v276
        %v713 = vunpack.c.l.b16 %v277
        %v714 = vunpack.c.h.b16 %v277
        %v715 = vunpack.c.l.b16 %v278
        %v716 = vunpack.c.h.b16 %v278
        %v717 = vunpack.c.l.b16 %v279
        %v718 = vunpack.c.h.b16 %v279
        %v719 = vunpack.c.l.b16 %v280
        %v720 = vunpack.c.h.b16 %v280
        %v721 = vunpack.c.l.b16 %v281
        %v722 = vunpack.c.h.b16 %v281
        %v723 = vunpack.c.l.b16 %v282
        %v724 = vunpack.c.h.b16 %v282
        %v725 = vunpack.c.l.b16 %v283
        %v726 = vunpack.c.h.b16 %v283
        %v727 = vunpack.c.l.b16 %v284
        %v728 = vunpack.c.h.b16 %v284
        %v729 = vunpack.c.l.b16 %v285
        %v730 = vunpack.c.h.b16 %v285
        %v731 = vunpack.c.l.b16 %v286
        %v732 = vunpack.c.h.b16 %v286
        %v733 = vunpack.c.l.b16 %v287
        %v734 = vunpack.c.h.b16 %v287
        %v735 = vunpack.c.l.b16 %v288
        %v736 = vunpack.c.h.b16 %v288
        %v737 = vunpack.c.l.b16 %v289
        %v738 = vunpack.c.h.b16 %v289
        %v739 = vunpack.c.l.b16 %v290
        %v740 = vunpack.c.h.b16 %v290
        %v741 = vunpack.c.l.b16 %v291
        %v742 = vunpack.c.h.b16 %v291
        %v743 = vunpack.c.l.b16 %v292
        %v744 = vunpack.c.h.b16 %v292
        %v745 = vunpack.c.l.b16 %v293
        %v746 = vunpack.c.h.b16 %v293
        %v747 = vunpack.c.l.b16 %v294
        %v748 = vunpack.c.h.b16 %v294
        %v749 = vunpack.c.l.b16 %v295
        %v750 = vunpack.c.h.b16 %v295
        %v751 = vunpack.c.l.b16 %v296
        %v752 = vunpack.c.h.b16 %v296
        %v753 = vunpack.c.l.b16 %v297
        %v754 = vunpack.c.h.b16 %v297
        %v755 = vunpack.c.l.b16 %v298
        %v756 = vunpack.c.h.b16 %v298
        %v757 = vunpack.c.l.b16 %v299
        %v758 = vunpack.c.h.b16 %v299
        %v759 = vunpack.c.l.b16 %v300
        %v760 = vunpack.c.h.b16 %v300
        %v761 = vunpack.c.l.b16 %v301
        %v762 = vunpack.c.h.b16 %v301
        %v763 = vunpack.c.l.b16 %v302
        %v764 = vunpack.c.h.b16 %v302
        %v765 = vunpack.c.l.b16 %v303
        %v766 = vunpack.c.h.b16 %v303
        %v767 = vunpack.c.l.b16 %v304
        %v768 = vunpack.c.h.b16 %v304
        %v769 = vunpack.c.l.b16 %v305
        %v770 = vunpack.c.h.b16 %v305
        %v771 = vunpack.c.l.b16 %v306
        %v772 = vunpack.c.h.b16 %v306
        %v773 = vunpack.c.l.b16 %v307
        %v774 = vunpack.c.h.b16 %v307
        %v775 = vunpack.c.l.b16 %v308
        %v776 = vunpack.c.h.b16 %v308
        %v777 = vunpack.c.l.b16 %v309
        %v778 = vunpack.c.h.b16 %v309
        %v779 = vunpack.c.l.b16 %v310
        %v780 = vunpack.c.h.b16 %v310
        %v781 = vunpack.c.l.b16 %v311
        %v782 = vunpack.c.h.b16 %v311
        %v783 = vunpack.c.l.b16 %v312
        %v784 = vunpack.c.h.b16 %v312
        %v785 = vunpack.c.l.b16 %v313
        %v786 = vunpack.c.h.b16 %v313
        %v787 = vunpack.c.l.b16 %v314
        %v788 = vunpack.c.h.b16 %v314
        %v789 = vunpack.c.l.b16 %v315
        %v790 = vunpack.c.h.b16 %v315
        %v791 = vunpack.c.l.b16 %v316
        %v792 = vunpack.c.h.b16 %v316
        %v793 = vunpack.c.l.b16 %v317
        %v794 = vunpack.c.h.b16 %v317
        %v795 = vunpack.c.l.b16 %v318
        %v796 = vunpack.c.h.b16 %v318
        %v797 = vunpack.c.l.b16 %v319
        %v798 = vunpack.c.h.b16 %v319
        %v799 = vunpack.c.l.b16 %v320
        %v800 = vunpack.c.h.b16 %v320
        %v801 = vunpack.c.l.b16 %v321
        %v802 = vunpack.c.h.b16 %v321
        %v803 = vunpack.c.l.b16 %v322
        %v804 = vunpack.c.h.b16 %v322
        %v805 = vunpack.c.l.b16 %v323
        %v806 = vunpack.c.h.b16 %v323
        %v807 = vunpack.c.l.b16 %v324
        %v808 = vunpack.c.h.b16 %v324
        %v809 = vunpack.c.l.b16 %v325
        %v810 = vunpack.c.h.b16 %v325
        %v811 = vunpack.c.l.b16 %v326
        %v812 = vunpack.c.h.b16 %v326
        %v813 = vunpack.c.l.b16 %v327
        %v814 = vunpack.c.h.b16 %v327
        %v815 = vunpack.c.l.b16 %v328
        %v816 = vunpack.c.h.b16 %v328
        %v817 = vunpack.c.l.b16 %v329
        %v818 = vunpack.c.h.b16 %v329
        %v819 = vunpack.c.l.b16 %v330
        %v820 = vunpack.c.h.b16 %v330
        %v821 = vunpack.c.l.b16 %v331
        %v822 = vunpack.c.h.b16 %v331
        %v823 = vunpack.c.l.b16 %v332
        %v824 = vunpack.c.h.b16 %v332
        %v825 = vunpack.c.l.b16 %v333
        %v826 = vunpack.c.h.b16 %v333
        %v827 = vunpack.c.l.b16 %v334
        %v828 = vunpack.c.h.b16 %v334
        %v829 = vunpack.c.l.b16 %v335
        %v830 = vunpack.c.h.b16 %v335
        %v831 = vunpack.c.l.b16 %v336
        %v832 = vunpack.c.h.b16 %v336
        %v833 = vunpack.c.l.b16 %v337
        %v834 = vunpack.c.h.b16 %v337
        %v835 = vunpack.c.l.b16 %v338
        %v836 = vunpack.c.h.b16 %v338
        %v837 = vunpack.c.l.b16 %v339
        %v838 = vunpack.c.h.b16 %v339
        %v839 = vunpack.c.l.b16 %v340
        %v840 = vunpack.c.h.b16 %v340
        %v841 = vunpack.c.l.b16 %v341
        %v842 = vunpack.c.h.b16 %v341
        %v843 = vunpack.c.l.b16 %v342
        %v844 = vunpack.c.h.b16 %v342
        %v845 = vunpack.c.l.b16 %v343
        %v846 = vunpack.c.h.b16 %v343
        %v847 = vunpack.c.l.b16 %v344
        %v848 = vunpack.c.h.b16 %v344
        %v849 = vunpack.c.l.b16 %v345
        %v850 = vunpack.c.h.b16 %v345
        %v851 = vunpack.c.l.b16 %v346
        %v852 = vunpack.c.h.b16 %v346
        %v853 = vunpack.c.l.b16 %v347
        %v854 = vunpack.c.h.b16 %v347
        %v855 = vunpack.c.l.b16 %v348
        %v856 = vunpack.c.h.b16 %v348
        %v857 = vunpack.c.l.b16 %v349
        %v858 = vunpack.c.h.b16 %v349
        %v859 = vunpack.c.l.b16 %v350
        %v860 = vunpack.c.h.b16 %v350
        %v861 = vunpack.c.l.b16 %v351
        %v862 = vunpack.c.h.b16 %v351
        %v863 = vunpack.c.l.b16 %v352
        %v864 = vunpack.c.h.b16 %v352
        %v865 = vunpack.c.l.b16 %v353
        %v866 = vunpack.c.h.b16 %v353
        %v867 = vunpack.c.l.b16 %v354
        %v868 = vunpack.c.h.b16 %v354
        %v869 = vunpack.c.l.b16 %v355
        %v870 = vunpack.c.h.b16 %v355
        %v871 = vunpack.c.l.b16 %v356
        %v872 = vunpack.c.h.b16 %v356
        %v873 = vunpack.c.l.b16 %v357
        %v874 = vunpack.c.h.b16 %v357
        %v875 = vunpack.c.l.b16 %v358
        %v876 = vunpack.c.h.b16 %v358
        %v877 = vunpack.c.l.b16 %v359
        %v878 = vunpack.c.h.b16 %v359
        %v879 = vunpack.c.l.b16 %v360
        %v880 = vunpack.c.h.b16 %v360
        %v881 = vunpack.c.l.b16 %v361
        %v882 = vunpack.c.h.b16 %v361
        %v883 = vunpack.c.l.b16 %v362
        %v884 = vunpack.c.h.b16 %v362
        %v885 = vunpack.c.l.b16 %v363
        %v886 = vunpack.c.h.b16 %v363
        %v887 = vunpack.c.l.b16 %v364
        %v888 = vunpack.c.h.b16 %v364
        %v889 = vunpack.c.l.b16 %v365
        %v890 = vunpack.c.h.b16 %v365
        %v891 = vunpack.c.l.b16 %v366
        %v892 = vunpack.c.h.b16 %v366
        %v893 = vunpack.c.l.b16 %v367
        %v894 = vunpack.c.h.b16 %v367
        %v895 = vunpack.c.l.b16 %v368
        %v896 = vunpack.c.h.b16 %v368
        %v897 = vunpack.c.l.b16 %v369
        %v898 = vunpack.c.h.b16 %v369
        %v899 = vunpack.c.l.b16 %v370
        %v900 = vunpack.c.h.b16 %v370
        %v901 = vunpack.c.l.b16 %v371
        %v902 = vunpack.c.h.b16 %v371
        %v903 = vunpack.c.l.b16 %v372
        %v904 = vunpack.c.h.b16 %v372
        %v905 = vunpack.c.l.b16 %v373
        %v906 = vunpack.c.h.b16 %v373
        %v907 = vunpack.c.l.b16 %v374
        %v908 = vunpack.c.h.b16 %v374
        %v909 = vunpack.c.l.b16 %v375
        %v910 = vunpack.c.h.b16 %v375
        %v911 = vunpack.c.l.b16 %v376
        %v912 = vunpack.c.h.b16 %v376
        %v913 = vunpack.c.l.b16 %v377
        %v914 = vunpack.c.h.b16 %v377
        %v915 = vunpack.c.l.b16 %v378
        %v916 = vunpack.c.h.b16 %v378
        %v917 = vunpack.c.l.b16 %v379
        %v918 = vunpack.c.h.b16 %v379
        %v919 = vunpack.c.l.b16 %v380
        %v920 = vunpack.c.h.b16 %v380
        %v921 = vunpack.c.l.b16 %v381
        %v922 = vunpack.c.h.b16 %v381
        %v923 = vunpack.c.l.b16 %v382
        %v924 = vunpack.c.h.b16 %v382
        %v925 = vunpack.c.l.b16 %v383
        %v926 = vunpack.c.h.b16 %v383
        %v927 = vunpack.c.l.b16 %v384
        %v928 = vunpack.c.h.b16 %v384
        %v929 = vunpack.c.l.b16 %v385
        %v930 = vunpack.c.h.b16 %v385
        %v931 = vunpack.c.l.b16 %v386
        %v932 = vunpack.c.h.b16 %v386
        %v933 = vunpack.c.l.b16 %v387
        %v934 = vunpack.c.h.b16 %v387
        %v935 = vunpack.c.l.b16 %v388
        %v936 = vunpack.c.h.b16 %v388
        %v937 = vunpack.c.l.b16 %v389
        %v938 = vunpack.c.h.b16 %v389
        %v939 = vunpack.c.l.b16 %v390
        %v940 = vunpack.c.h.b16 %v390
        %v941 = vunpack.c.l.b16 %v391
        %v942 = vunpack.c.h.b16 %v391
        %v943 = vunpack.c.l.b16 %v392
        %v944 = vunpack.c.h.b16 %v392
        %v945 = vunpack.c.l.b16 %v393
        %v946 = vunpack.c.h.b16 %v393
        %v947 = vunpack.c.l.b16 %v394
        %v948 = vunpack.c.h.b16 %v394
        %v949 = vunpack.c.l.b16 %v395
        %v950 = vunpack.c.h.b16 %v395
        %v951 = vunpack.c.l.b16 %v396
        %v952 = vunpack.c.h.b16 %v396
        %v953 = vunpack.c.l.b16 %v397
        %v954 = vunpack.c.h.b16 %v397
        %v955 = vunpack.c.l.b16 %v398
        %v956 = vunpack.c.h.b16 %v398
        %v957 = vunpack.c.l.b16 %v399
        %v958 = vunpack.c.h.b16 %v399
        %v959 = vunpack.c.l.b16 %v400
        %v960 = vunpack.c.h.b16 %v400
        %v961 = vunpack.c.l.b16 %v401
        %v962 = vunpack.c.h.b16 %v401
        %v963 = vunpack.c.l.b16 %v402
        %v964 = vunpack.c.h.b16 %v402
        %v965 = vunpack.c.l.b16 %v403
        %v966 = vunpack.c.h.b16 %v403
        %v967 = vunpack.c.l.b16 %v404
        %v968 = vunpack.c.h.b16 %v404
        %v969 = vunpack.c.l.b16 %v405
        %v970 = vunpack.c.h.b16 %v405
        %v971 = vunpack.c.l.b16 %v406
        %v972 = vunpack.c.h.b16 %v406
        %v973 = vunpack.c.l.b16 %v407
        %v974 = vunpack.c.h.b16 %v407
        %v975 = vunpack.c.l.b16 %v408
        %v976 = vunpack.c.h.b16 %v408
        %v977 = vunpack.c.l.b16 %v409
        %v978 = vunpack.c.h.b16 %v409
        %v979 = vunpack.c.l.b16 %v410
        %v980 = vunpack.c.h.b16 %v410
        %v981 = vunpack.c.l.b16 %v411
        %v982 = vunpack.c.h.b16 %v411
        %v983 = vunpack.c.l.b16 %v412
        %v984 = vunpack.c.h.b16 %v412
        %v985 = vunpack.c.l.b16 %v413
        %v986 = vunpack.c.h.b16 %v413
        %v987 = vunpack.c.l.b16 %v414
        %v988 = vunpack.c.h.b16 %v414
        %v989 = vunpack.c.l.b16 %v415
        %v990 = vunpack.c.h.b16 %v415
        %v991 = vunpack.c.l.b16 %v416
        %v992 = vunpack.c.h.b16 %v416
        %v993 = vunpack.c.l.b16 %v417
        %v994 = vunpack.c.h.b16 %v417
        %v995 = vunpack.c.l.b16 %v418
        %v996 = vunpack.c.h.b16 %v418
        %v997 = vunpack.c.l.b16 %v419
        %v998 = vunpack.c.h.b16 %v419
        %v999 = vunpack.c.l.b16 %v420
        %v1000 = vunpack.c.h.b16 %v420
        %v1001 = vunpack.c.l.b16 %v421
        %v1002 = vunpack.c.h.b16 %v421
        %v1003 = vunpack.c.l.b16 %v422
        %v1004 = vunpack.c.h.b16 %v422
        %v1005 = vunpack.c.l.b16 %v423
        %v1006 = vunpack.c.h.b16 %v423
        %v1007 = vunpack.c.l.b16 %v424
        %v1008 = vunpack.c.h.b16 %v424
        %v1009 = vunpack.c.l.b16 %v425
        %v1010 = vunpack.c.h.b16 %v425
        %v1011 = vunpack.c.l.b16 %v426
        %v1012 = vunpack.c.h.b16 %v426
        %v1013 = vunpack.c.l.b16 %v427
        %v1014 = vunpack.c.h.b16 %v427
        %v1015 = vunpack.c.l.b16 %v428
        %v1016 = vunpack.c.h.b16 %v428
        %v1017 = vunpack.c.l.b16 %v429
        %v1018 = vunpack.c.h.b16 %v429
        %v1019 = vunpack.c.l.b16 %v430
        %v1020 = vunpack.c.h.b16 %v430
        %v1021 = vunpack.c.l.b16 %v431
        %v1022 = vunpack.c.h.b16 %v431
        %v1023 = vunpack.c.l.b16 %v432
        %v1024 = vunpack.c.h.b16 %v432
        %v1025 = vunpack.c.l.b16 %v433
        %v1026 = vunpack.c.h.b16 %v433
        %v1027 = vunpack.c.l.b16 %v434
        %v1028 = vunpack.c.h.b16 %v434
        %v1029 = vunpack.c.l.b16 %v435
        %v1030 = vunpack.c.h.b16 %v435
        %v1031 = vunpack.c.l.b16 %v436
        %v1032 = vunpack.c.h.b16 %v436
        %v1033 = vunpack.c.l.b16 %v437
        %v1034 = vunpack.c.h.b16 %v437
        %v1035 = vunpack.c.l.b16 %v438
        %v1036 = vunpack.c.h.b16 %v438
        %v1037 = vunpack.c.l.b16 %v439
        %v1038 = vunpack.c.h.b16 %v439
        %v1039 = vunpack.c.l.b16 %v440
        %v1040 = vunpack.c.h.b16 %v440
        %v1041 = vunpack.c.l.b16 %v441
        %v1042 = vunpack.c.h.b16 %v441
        %v1043 = vunpack.c.l.b16 %v442
        %v1044 = vunpack.c.h.b16 %v442
        %v1045 = vunpack.c.l.b16 %v443
        %v1046 = vunpack.c.h.b16 %v443
        %v1047 = vunpack.c.l.b16 %v444
        %v1048 = vunpack.c.h.b16 %v444
        %v1049 = vunpack.c.l.b16 %v445
        %v1050 = vunpack.c.h.b16 %v445
        %v1051 = vunpack.c.l.b16 %v446
        %v1052 = vunpack.c.h.b16 %v446
        %v1053 = vunpack.c.l.b16 %v447
        %v1054 = vunpack.c.h.b16 %v447
        %v1055 = vunpack.c.l.b16 %v448
        %v1056 = vunpack.c.h.b16 %v448
        %v1057 = vunpack.c.l.b16 %v449
        %v1058 = vunpack.c.h.b16 %v449
        %v1059 = vunpack.c.l.b16 %v450
        %v1060 = vunpack.c.h.b16 %v450
        %v1061 = vunpack.c.l.b16 %v451
        %v1062 = vunpack.c.h.b16 %v451
        %v1063 = vunpack.c.l.b16 %v452
        %v1064 = vunpack.c.h.b16 %v452
        %v1065 = vunpack.c.l.b16 %v453
        %v1066 = vunpack.c.h.b16 %v453
        %v1067 = vunpack.c.l.b16 %v454
        %v1068 = vunpack.c.h.b16 %v454
        %v1069 = vunpack.c.l.b16 %v455
        %v1070 = vunpack.c.h.b16 %v455
        %v1071 = vunpack.c.l.b16 %v456
        %v1072 = vunpack.c.h.b16 %v456
        %v1073 = vunpack.c.l.b16 %v457
        %v1074 = vunpack.c.h.b16 %v457
        %v1075 = vunpack.c.l.b16 %v458
        %v1076 = vunpack.c.h.b16 %v458
        %v1077 = vunpack.c.l.b16 %v459
        %v1078 = vunpack.c.h.b16 %v459
        %v1079 = vunpack.c.l.b16 %v460
        %v1080 = vunpack.c.h.b16 %v460
        %v1081 = vunpack.c.l.b16 %v461
        %v1082 = vunpack.c.h.b16 %v461
        %v1083 = vunpack.c.l.b16 %v462
        %v1084 = vunpack.c.h.b16 %v462
        %v1085 = vunpack.c.l.b16 %v463
        %v1086 = vunpack.c.h.b16 %v463
        %v1087 = vpack.c.b16 %v697, %v695
        %v1088 = vpack.c.b16 %v698, %v696
        %v1089 = vpack.c.b16 %v701, %v699
        %v1090 = vpack.c.b16 %v702, %v700
        %v1091 = vpack.c.b16 %v705, %v703
        %v1092 = vpack.c.b16 %v706, %v704
        %v1093 = vpack.c.b16 %v709, %v707
        %v1094 = vpack.c.b16 %v710, %v708
        %v1095 = vpack.c.b16 %v713, %v711
        %v1096 = vpack.c.b16 %v714, %v712
        %v1097 = vpack.c.b16 %v717, %v715
        %v1098 = vpack.c.b16 %v718, %v716
        %v1099 = vpack.c.b16 %v721, %v719
        %v1100 = vpack.c.b16 %v722, %v720
        %v1101 = vpack.c.b16 %v725, %v723
        %v1102 = vpack.c.b16 %v726, %v724
        %v1103 = vpack.c.b16 %v729, %v727
        %v1104 = vpack.c.b16 %v730, %v728
        %v1105 = vpack.c.b16 %v733, %v731
        %v1106 = vpack.c.b16 %v734, %v732
        %v1107 = vpack.c.b16 %v737, %v735
        %v1108 = vpack.c.b16 %v738, %v736
        %v1109 = vpack.c.b16 %v741, %v739
        %v1110 = vpack.c.b16 %v742, %v740
        %v1111 = vpack.c.b16 %v745, %v743
        %v1112 = vpack.c.b16 %v746, %v744
        %v1113 = vpack.c.b16 %v749, %v747
        %v1114 = vpack.c.b16 %v750, %v748
        %v1115 = vpack.c.b16 %v753, %v751
        %v1116 = vpack.c.b16 %v754, %v752
        %v1117 = vpack.c.b16 %v757, %v755
        %v1118 = vpack.c.b16 %v758, %v756
        %v1119 = vpack.c.b16 %v761, %v759
        %v1120 = vpack.c.b16 %v762, %v760
        %v1121 = vpack.c.b16 %v765, %v763
        %v1122 = vpack.c.b16 %v766, %v764
        %v1123 = vpack.c.b16 %v769, %v767
        %v1124 = vpack.c.b16 %v770, %v768
        %v1125 = vpack.c.b16 %v773, %v771
        %v1126 = vpack.c.b16 %v774, %v772
        %v1127 = vpack.c.b16 %v777, %v775
        %v1128 = vpack.c.b16 %v778, %v776
        %v1129 = vpack.c.b16 %v781, %v779
        %v1130 = vpack.c.b16 %v782, %v780
        %v1131 = vpack.c.b16 %v785, %v783
        %v1132 = vpack.c.b16 %v786, %v784
        %v1133 = vpack.c.b16 %v789, %v787
        %v1134 = vpack.c.b16 %v790, %v788
        %v1135 = vpack.c.b16 %v793, %v791
        %v1136 = vpack.c.b16 %v794, %v792
        %v1137 = vpack.c.b16 %v797, %v795
        %v1138 = vpack.c.b16 %v798, %v796
        %v1139 = vpack.c.b16 %v801, %v799
        %v1140 = vpack.c.b16 %v802, %v800
        %v1141 = vpack.c.b16 %v805, %v803
        %v1142 = vpack.c.b16 %v806, %v804
        %v1143 = vpack.c.b16 %v809, %v807
        %v1144 = vpack.c.b16 %v810, %v808
        %v1145 = vpack.c.b16 %v813, %v811
        %v1146 = vpack.c.b16 %v814, %v812
        %v1147 = vpack.c.b16 %v817, %v815
        %v1148 = vpack.c.b16 %v818, %v816
        %v1149 = vpack.c.b16 %v821, %v819
        %v1150 = vpack.c.b16 %v822, %v820
        %v1151 = vpack.c.b16 %v825, %v823
        %v1152 = vpack.c.b16 %v826, %v824
        %v1153 = vpack.c.b16 %v829, %v827
        %v1154 = vpack.c.b16 %v830, %v828
        %v1155 = vpack.c.b16 %v833, %v831
        %v1156 = vpack.c.b16 %v834, %v832
        %v1157 = vpack.c.b16 %v837, %v835
        %v1158 = vpack.c.b16 %v838, %v836
        %v1159 = vpack.c.b16 %v841, %v839
        %v1160 = vpack.c.b16 %v842, %v840
        %v1161 = vpack.c.b16 %v845, %v843
        %v1162 = vpack.c.b16 %v846, %v844
        %v1163 = vpack.c.b16 %v849, %v847
        %v1164 = vpack.c.b16 %v850, %v848
        %v1165 = vpack.c.b16 %v853, %v851
        %v1166 = vpack.c.b16 %v854, %v852
        %v1167 = vpack.c.b16 %v857, %v855
        %v1168 = vpack.c.b16 %v858, %v856
        %v1169 = vpack.c.b16 %v861, %v859
        %v1170 = vpack.c.b16 %v862, %v860
        %v1171 = vpack.c.b16 %v865, %v863
        %v1172 = vpack.c.b16 %v866, %v864
        %v1173 = vpack.c.b16 %v869, %v867
        %v1174 = vpack.c.b16 %v870, %v868
        %v1175 = vpack.c.b16 %v873, %v871
        %v1176 = vpack.c.b16 %v874, %v872
        %v1177 = vpack.c.b16 %v877, %v875
        %v1178 = vpack.c.b16 %v878, %v876
        %v1179 = vpack.c.b16 %v881, %v879
        %v1180 = vpack.c.b16 %v882, %v880
        %v1181 = vpack.c.b16 %v885, %v883
        %v1182 = vpack.c.b16 %v886, %v884
        %v1183 = vpack.c.b16 %v889, %v887
        %v1184 = vpack.c.b16 %v890, %v888
        %v1185 = vpack.c.b16 %v893, %v891
        %v1186 = vpack.c.b16 %v894, %v892
        %v1187 = vpack.c.b16 %v897, %v895
        %v1188 = vpack.c.b16 %v898, %v896
        %v1189 = vpack.c.b16 %v901, %v899
        %v1190 = vpack.c.b16 %v902, %v900
        %v1191 = vpack.c.b16 %v905, %v903
        %v1192 = vpack.c.b16 %v906, %v904
        %v1193 = vpack.c.b16 %v909, %v907
        %v1194 = vpack.c.b16 %v910, %v908
        %v1195 = vpack.c.b16 %v913, %v911
        %v1196 = vpack.c.b16 %v914, %v912
        %v1197 = vpack.c.b16 %v917, %v915
        %v1198 = vpack.c.b16 %v918, %v916
        %v1199 = vpack.c.b16 %v921, %v919
        %v1200 = vpack.c.b16 %v922, %v920
        %v1201 = vpack.c.b16 %v925, %v923
        %v1202 = vpack.c.b16 %v926, %v924
        %v1203 = vpack.c.b16 %v929, %v927
        %v1204 = vpack.c.b16 %v930, %v928
        %v1205 = vpack.c.b16 %v933, %v931
        %v1206 = vpack.c.b16 %v934, %v932
        %v1207 = vpack.c.b16 %v937, %v935
        %v1208 = vpack.c.b16 %v938, %v936
        %v1209 = vpack.c.b16 %v941, %v939
        %v1210 = vpack.c.b16 %v942, %v940
        %v1211 = vpack.c.b16 %v945, %v943
        %v1212 = vpack.c.b16 %v946, %v944
        %v1213 = vpack.c.b16 %v949, %v947
        %v1214 = vpack.c.b16 %v950, %v948
        %v1215 = vpack.c.b16 %v953, %v951
        %v1216 = vpack.c.b16 %v954, %v952
        %v1217 = vpack.c.b16 %v957, %v955
        %v1218 = vpack.c.b16 %v958, %v956
        %v1219 = vpack.c.b16 %v961, %v959
        %v1220 = vpack.c.b16 %v962, %v960
        %v1221 = vpack.c.b16 %v965, %v963
        %v1222 = vpack.c.b16 %v966, %v964
        %v1223 = vpack.c.b16 %v969, %v967
        %v1224 = vpack.c.b16 %v970, %v968
        %v1225 = vpack.c.b16 %v973, %v971
        %v1226 = vpack.c.b16 %v974, %v972
        %v1227 = vpack.c.b16 %v977, %v975
        %v1228 = vpack.c.b16 %v978, %v976
        %v1229 = vpack.c.b16 %v981, %v979
        %v1230 = vpack.c.b16 %v982, %v980
        %v1231 = vpack.c.b16 %v985, %v983
        %v1232 = vpack.c.b16 %v986, %v984
        %v1233 = vpack.c.b16 %v989, %v987
        %v1234 = vpack.c.b16 %v990, %v988
        %v1235 = vpack.c.b16 %v993, %v991
        %v1236 = vpack.c.b16 %v994, %v992
        %v1237 = vpack.c.b16 %v997, %v995
        %v1238 = vpack.c.b16 %v998, %v996
        %v1239 = vpack.c.b16 %v1001, %v999
        %v1240 = vpack.c.b16 %v1002, %v1000
        %v1241 = vpack.c.b16 %v1005, %v1003
        %v1242 = vpack.c.b16 %v1006, %v1004
        %v1243 = vpack.c.b16 %v1009, %v1007
        %v1244 = vpack.c.b16 %v1010, %v1008
        %v1245 = vpack.c.b16 %v1013, %v1011
        %v1246 = vpack.c.b16 %v1014, %v1012
        %v1247 = vpack.c.b16 %v1017, %v1015
        %v1248 = vpack.c.b16 %v1018, %v1016
        %v1249 = vpack.c.b16 %v1021, %v1019
        %v1250 = vpack.c.b16 %v1022, %v1020
        %v1251 = vpack.c.b16 %v1025, %v1023
        %v1252 = vpack.c.b16 %v1026, %v1024
        %v1253 = vpack.c.b16 %v1029, %v1027
        %v1254 = vpack.c.b16 %v1030, %v1028
        %v1255 = vpack.c.b16 %v1033, %v1031
        %v1256 = vpack.c.b16 %v1034, %v1032
        %v1257 = vpack.c.b16 %v1037, %v1035
        %v1258 = vpack.c.b16 %v1038, %v1036
        %v1259 = vpack.c.b16 %v1041, %v1039
        %v1260 = vpack.c.b16 %v1042, %v1040
        %v1261 = vpack.c.b16 %v1045, %v1043
        %v1262 = vpack.c.b16 %v1046, %v1044
        %v1263 = vpack.c.b16 %v1049, %v1047
        %v1264 = vpack.c.b16 %v1050, %v1048
        %v1265 = vpack.c.b16 %v1053, %v1051
        %v1266 = vpack.c.b16 %v1054, %v1052
        %v1267 = vpack.c.b16 %v1057, %v1055
        %v1268 = vpack.c.b16 %v1058, %v1056
        %v1269 = vpack.c.b16 %v1061, %v1059
        %v1270 = vpack.c.b16 %v1062, %v1060
        %v1271 = vpack.c.b16 %v1065, %v1063
        %v1272 = vpack.c.b16 %v1066, %v1064
        %v1273 = vpack.c.b16 %v1069, %v1067
        %v1274 = vpack.c.b16 %v1070, %v1068
        %v1275 = vpack.c.b16 %v1073, %v1071
        %v1276 = vpack.c.b16 %v1074, %v1072
        %v1277 = vpack.c.b16 %v1077, %v1075
        %v1278 = vpack.c.b16 %v1078, %v1076
        %v1279 = vpack.c.b16 %v1081, %v1079
        %v1280 = vpack.c.b16 %v1082, %v1080
        %v1281 = vpack.c.b16 %v1085, %v1083
        %v1282 = vpack.c.b16 %v1086, %v1084
        %vm1479 = vcmask 261120
        %v1480 = vsel %vm1479, %v486, 0
        %1482 = vmatpush.bf16.msra.mxu0 %v1101
        %1483 = vmatpush.bf16.msra.mxu0 %v1099
        %1484 = vmatpush.bf16.msra.mxu0 %v1097
        %1485 = vmatpush.bf16.msra.mxu0 %v1095
        %1486 = vmatpush.bf16.msra.mxu0 %v1093
        %1487 = vmatpush.bf16.msra.mxu0 %v1091
        %1488 = vmatpush.bf16.msra.mxu0 %v1089
        %1489 = vmatpush.bf16.msra.mxu0 %v1087
        %1490 = vmatmul.bf16.gmra.mxu0 %v472
        %v1491 = vpop.f32.mrf.mxu0
        %v1492 = vadd.f32 %v466, %v1491
        %v1493 = vpop.f32.mrf.mxu0
        %1494 = vdwg.mxu0
        %1495 = vmatpush.bf16.msra.mxu0 %v1117
        %1496 = vmatpush.bf16.msra.mxu0 %v1115
        %1497 = vmatpush.bf16.msra.mxu0 %v1113
        %1498 = vmatpush.bf16.msra.mxu0 %v1111
        %1499 = vmatpush.bf16.msra.mxu0 %v1109
        %1500 = vmatpush.bf16.msra.mxu0 %v1107
        %1501 = vmatpush.bf16.msra.mxu0 %v1105
        %1502 = vmatpush.bf16.msra.mxu0 %v1103
        %1503 = vmatmul.bf16.gmra.mxu0 %v473
        %v1504 = vpop.f32.mrf.mxu0
        %v1505 = vadd.f32 %v1492, %v1504
        %v1506 = vpop.f32.mrf.mxu0
        %1507 = vdwg.mxu0
        %1508 = vmatpush.bf16.msra.mxu0 %v1133
        %1509 = vmatpush.bf16.msra.mxu0 %v1131
        %1510 = vmatpush.bf16.msra.mxu0 %v1129
        %1511 = vmatpush.bf16.msra.mxu0 %v1127
        %1512 = vmatpush.bf16.msra.mxu0 %v1125
        %1513 = vmatpush.bf16.msra.mxu0 %v1123
        %1514 = vmatpush.bf16.msra.mxu0 %v1121
        %1515 = vmatpush.bf16.msra.mxu0 %v1119
        %1516 = vmatmul.bf16.gmra.mxu0 %v474
        %v1517 = vpop.f32.mrf.mxu0
        %v1518 = vadd.f32 %v1505, %v1517
        %v1519 = vpop.f32.mrf.mxu0
        %1520 = vdwg.mxu0
        %1521 = vmatpush.bf16.msra.mxu0 %v1149
        %1522 = vmatpush.bf16.msra.mxu0 %v1147
        %1523 = vmatpush.bf16.msra.mxu0 %v1145
        %1524 = vmatpush.bf16.msra.mxu0 %v1143
        %1525 = vmatpush.bf16.msra.mxu0 %v1141
        %1526 = vmatpush.bf16.msra.mxu0 %v1139
        %1527 = vmatpush.bf16.msra.mxu0 %v1137
        %1528 = vmatpush.bf16.msra.mxu0 %v1135
        %1529 = vmatmul.bf16.gmra.mxu0 %v475
        %v1530 = vpop.f32.mrf.mxu0
        %v1531 = vadd.f32 %v1518, %v1530
        %v1532 = vpop.f32.mrf.mxu0
        %1533 = vdwg.mxu0
        %1534 = vmatpush.bf16.msra.mxu0 %v1165
        %1535 = vmatpush.bf16.msra.mxu0 %v1163
        %1536 = vmatpush.bf16.msra.mxu0 %v1161
        %1537 = vmatpush.bf16.msra.mxu0 %v1159
        %1538 = vmatpush.bf16.msra.mxu0 %v1157
        %1539 = vmatpush.bf16.msra.mxu0 %v1155
        %1540 = vmatpush.bf16.msra.mxu0 %v1153
        %1541 = vmatpush.bf16.msra.mxu0 %v1151
        %1542 = vmatmul.bf16.gmra.mxu0 %v476
        %v1543 = vpop.f32.mrf.mxu0
        %v1544 = vadd.f32 %v1531, %v1543
        %v1545 = vpop.f32.mrf.mxu0
        %1546 = vdwg.mxu0
        %1547 = vmatpush.bf16.msra.mxu0 %v1181
        %1548 = vmatpush.bf16.msra.mxu0 %v1179
        %1549 = vmatpush.bf16.msra.mxu0 %v1177
        %1550 = vmatpush.bf16.msra.mxu0 %v1175
        %1551 = vmatpush.bf16.msra.mxu0 %v1173
        %1552 = vmatpush.bf16.msra.mxu0 %v1171
        %1553 = vmatpush.bf16.msra.mxu0 %v1169
        %1554 = vmatpush.bf16.msra.mxu0 %v1167
        %1555 = vmatmul.bf16.gmra.mxu0 %v477
        %v1556 = vpop.f32.mrf.mxu0
        %v1557 = vadd.f32 %v1544, %v1556
        %v1558 = vpop.f32.mrf.mxu0
        %1559 = vdwg.mxu0
        %1560 = vmatpush.bf16.msra.mxu0 %v1197
        %1561 = vmatpush.bf16.msra.mxu0 %v1195
        %1562 = vmatpush.bf16.msra.mxu0 %v1193
        %1563 = vmatpush.bf16.msra.mxu0 %v1191
        %1564 = vmatpush.bf16.msra.mxu0 %v1189
        %1565 = vmatpush.bf16.msra.mxu0 %v1187
        %1566 = vmatpush.bf16.msra.mxu0 %v1185
        %1567 = vmatpush.bf16.msra.mxu0 %v1183
        %1568 = vmatmul.bf16.gmra.mxu0 %v478
        %v1569 = vpop.f32.mrf.mxu0
        %v1570 = vadd.f32 %v1557, %v1569
        %v1571 = vpop.f32.mrf.mxu0
        %1572 = vdwg.mxu0
        %1573 = vmatpush.bf16.msra.mxu0 %v1213
        %1574 = vmatpush.bf16.msra.mxu0 %v1211
        %1575 = vmatpush.bf16.msra.mxu0 %v1209
        %1576 = vmatpush.bf16.msra.mxu0 %v1207
        %1577 = vmatpush.bf16.msra.mxu0 %v1205
        %1578 = vmatpush.bf16.msra.mxu0 %v1203
        %1579 = vmatpush.bf16.msra.mxu0 %v1201
        %1580 = vmatpush.bf16.msra.mxu0 %v1199
        %1581 = vmatmul.bf16.gmra.mxu0 %v479
        %v1582 = vpop.f32.mrf.mxu0
        %v1583 = vadd.f32 %v1570, %v1582
        %v1584 = vpop.f32.mrf.mxu0
        %1585 = vdwg.mxu0
        %1586 = vmatpush.bf16.msra.mxu0 %v1229
        %1587 = vmatpush.bf16.msra.mxu0 %v1227
        %1588 = vmatpush.bf16.msra.mxu0 %v1225
        %1589 = vmatpush.bf16.msra.mxu0 %v1223
        %1590 = vmatpush.bf16.msra.mxu0 %v1221
        %1591 = vmatpush.bf16.msra.mxu0 %v1219
        %1592 = vmatpush.bf16.msra.mxu0 %v1217
        %1593 = vmatpush.bf16.msra.mxu0 %v1215
        %1594 = vmatmul.bf16.gmra.mxu0 %v482
        %v1595 = vpop.f32.mrf.mxu0
        %v1596 = vadd.f32 %v1583, %v1595
        %v1597 = vpop.f32.mrf.mxu0
        %1598 = vdwg.mxu0
        %1599 = vmatpush.bf16.msra.mxu0 %v1245
        %1600 = vmatpush.bf16.msra.mxu0 %v1243
        %1601 = vmatpush.bf16.msra.mxu0 %v1241
        %1602 = vmatpush.bf16.msra.mxu0 %v1239
        %1603 = vmatpush.bf16.msra.mxu0 %v1237
        %1604 = vmatpush.bf16.msra.mxu0 %v1235
        %1605 = vmatpush.bf16.msra.mxu0 %v1233
        %1606 = vmatpush.bf16.msra.mxu0 %v1231
        %1607 = vmatmul.bf16.gmra.mxu0 %v483
        %v1608 = vpop.f32.mrf.mxu0
        %v1609 = vadd.f32 %v1596, %v1608
        %v1610 = vpop.f32.mrf.mxu0
        %1611 = vdwg.mxu0
        %1612 = vmatpush.bf16.msra.mxu0 %v1261
        %1613 = vmatpush.bf16.msra.mxu0 %v1259
        %1614 = vmatpush.bf16.msra.mxu0 %v1257
        %1615 = vmatpush.bf16.msra.mxu0 %v1255
        %1616 = vmatpush.bf16.msra.mxu0 %v1253
        %1617 = vmatpush.bf16.msra.mxu0 %v1251
        %1618 = vmatpush.bf16.msra.mxu0 %v1249
        %1619 = vmatpush.bf16.msra.mxu0 %v1247
        %1620 = vmatmul.bf16.gmra.mxu0 %v484
        %v1621 = vpop.f32.mrf.mxu0
        %v1622 = vadd.f32 %v1609, %v1621
        %v1623 = vpop.f32.mrf.mxu0
        %1624 = vdwg.mxu0
        %1625 = vmatpush.bf16.msra.mxu0 %v1277
        %1626 = vmatpush.bf16.msra.mxu0 %v1275
        %1627 = vmatpush.bf16.msra.mxu0 %v1273
        %1628 = vmatpush.bf16.msra.mxu0 %v1271
        %1629 = vmatpush.bf16.msra.mxu0 %v1269
        %1630 = vmatpush.bf16.msra.mxu0 %v1267
        %1631 = vmatpush.bf16.msra.mxu0 %v1265
        %1632 = vmatpush.bf16.msra.mxu0 %v1263
        %1633 = vmatmul.bf16.gmra.mxu0 %v485
        %v1634 = vpop.f32.mrf.mxu0
        %v1635 = vadd.f32 %v1622, %v1634
        %v1636 = vpop.f32.mrf.mxu0
        %1637 = vdwg.mxu0
        %1638 = vmatpush.bf16.msra.mxu0 0
        %1639 = vmatpush.bf16.msra.mxu0 0
        %1640 = vmatpush.bf16.msra.mxu0 0
        %1641 = vmatpush.bf16.msra.mxu0 0
        %1642 = vmatpush.bf16.msra.mxu0 0
        %1643 = vmatpush.bf16.msra.mxu0 0
        %1644 = vmatpush.bf16.msra.mxu0 %v1281
        %1645 = vmatpush.bf16.msra.mxu0 %v1279
        %1646 = vmatmul.bf16.gmra.mxu0 %v1480
        %v1647 = vpop.f32.mrf.mxu0
        %v1648 = vadd.f32 %v1635, %v1647
        %v1649 = vpop.f32.mrf.mxu0
        %1650 = vdwg.mxu0
        %1651 = vmatpush.bf16.msra.mxu0 %v1102
        %1652 = vmatpush.bf16.msra.mxu0 %v1100
        %1653 = vmatpush.bf16.msra.mxu0 %v1098
        %1654 = vmatpush.bf16.msra.mxu0 %v1096
        %1655 = vmatpush.bf16.msra.mxu0 %v1094
        %1656 = vmatpush.bf16.msra.mxu0 %v1092
        %1657 = vmatpush.bf16.msra.mxu0 %v1090
        %1658 = vmatpush.bf16.msra.mxu0 %v1088
        %1659 = vmatmul.bf16.gmra.mxu0 %v472
        %v1660 = vpop.f32.mrf.mxu0
        %v1661 = vadd.f32 %v467, %v1660
        %v1662 = vpop.f32.mrf.mxu0
        %1663 = vdwg.mxu0
        %1664 = vmatpush.bf16.msra.mxu0 %v1118
        %1665 = vmatpush.bf16.msra.mxu0 %v1116
        %1666 = vmatpush.bf16.msra.mxu0 %v1114
        %1667 = vmatpush.bf16.msra.mxu0 %v1112
        %1668 = vmatpush.bf16.msra.mxu0 %v1110
        %1669 = vmatpush.bf16.msra.mxu0 %v1108
        %1670 = vmatpush.bf16.msra.mxu0 %v1106
        %1671 = vmatpush.bf16.msra.mxu0 %v1104
        %1672 = vmatmul.bf16.gmra.mxu0 %v473
        %v1673 = vpop.f32.mrf.mxu0
        %v1674 = vadd.f32 %v1661, %v1673
        %v1675 = vpop.f32.mrf.mxu0
        %1676 = vdwg.mxu0
        %1677 = vmatpush.bf16.msra.mxu0 %v1134
        %1678 = vmatpush.bf16.msra.mxu0 %v1132
        %1679 = vmatpush.bf16.msra.mxu0 %v1130
        %1680 = vmatpush.bf16.msra.mxu0 %v1128
        %1681 = vmatpush.bf16.msra.mxu0 %v1126
        %1682 = vmatpush.bf16.msra.mxu0 %v1124
        %1683 = vmatpush.bf16.msra.mxu0 %v1122
        %1684 = vmatpush.bf16.msra.mxu0 %v1120
        %1685 = vmatmul.bf16.gmra.mxu0 %v474
        %v1686 = vpop.f32.mrf.mxu0
        %v1687 = vadd.f32 %v1674, %v1686
        %v1688 = vpop.f32.mrf.mxu0
        %1689 = vdwg.mxu0
        %1690 = vmatpush.bf16.msra.mxu0 %v1150
        %1691 = vmatpush.bf16.msra.mxu0 %v1148
        %1692 = vmatpush.bf16.msra.mxu0 %v1146
        %1693 = vmatpush.bf16.msra.mxu0 %v1144
        %1694 = vmatpush.bf16.msra.mxu0 %v1142
        %1695 = vmatpush.bf16.msra.mxu0 %v1140
        %1696 = vmatpush.bf16.msra.mxu0 %v1138
        %1697 = vmatpush.bf16.msra.mxu0 %v1136
        %1698 = vmatmul.bf16.gmra.mxu0 %v475
        %v1699 = vpop.f32.mrf.mxu0
        %v1700 = vadd.f32 %v1687, %v1699
        %v1701 = vpop.f32.mrf.mxu0
        %1702 = vdwg.mxu0
        %1703 = vmatpush.bf16.msra.mxu0 %v1166
        %1704 = vmatpush.bf16.msra.mxu0 %v1164
        %1705 = vmatpush.bf16.msra.mxu0 %v1162
        %1706 = vmatpush.bf16.msra.mxu0 %v1160
        %1707 = vmatpush.bf16.msra.mxu0 %v1158
        %1708 = vmatpush.bf16.msra.mxu0 %v1156
        %1709 = vmatpush.bf16.msra.mxu0 %v1154
        %1710 = vmatpush.bf16.msra.mxu0 %v1152
        %1711 = vmatmul.bf16.gmra.mxu0 %v476
        %v1712 = vpop.f32.mrf.mxu0
        %v1713 = vadd.f32 %v1700, %v1712
        %v1714 = vpop.f32.mrf.mxu0
        %1715 = vdwg.mxu0
        %1716 = vmatpush.bf16.msra.mxu0 %v1182
        %1717 = vmatpush.bf16.msra.mxu0 %v1180
        %1718 = vmatpush.bf16.msra.mxu0 %v1178
        %1719 = vmatpush.bf16.msra.mxu0 %v1176
        %1720 = vmatpush.bf16.msra.mxu0 %v1174
        %1721 = vmatpush.bf16.msra.mxu0 %v1172
        %1722 = vmatpush.bf16.msra.mxu0 %v1170
        %1723 = vmatpush.bf16.msra.mxu0 %v1168
        %1724 = vmatmul.bf16.gmra.mxu0 %v477
        %v1725 = vpop.f32.mrf.mxu0
        %v1726 = vadd.f32 %v1713, %v1725
        %v1727 = vpop.f32.mrf.mxu0
        %1728 = vdwg.mxu0
        %1729 = vmatpush.bf16.msra.mxu0 %v1198
        %1730 = vmatpush.bf16.msra.mxu0 %v1196
        %1731 = vmatpush.bf16.msra.mxu0 %v1194
        %1732 = vmatpush.bf16.msra.mxu0 %v1192
        %1733 = vmatpush.bf16.msra.mxu0 %v1190
        %1734 = vmatpush.bf16.msra.mxu0 %v1188
        %1735 = vmatpush.bf16.msra.mxu0 %v1186
        %1736 = vmatpush.bf16.msra.mxu0 %v1184
        %1737 = vmatmul.bf16.gmra.mxu0 %v478
        %v1738 = vpop.f32.mrf.mxu0
        %v1739 = vadd.f32 %v1726, %v1738
        %v1740 = vpop.f32.mrf.mxu0
        %1741 = vdwg.mxu0
        %1742 = vmatpush.bf16.msra.mxu0 %v1214
        %1743 = vmatpush.bf16.msra.mxu0 %v1212
        %1744 = vmatpush.bf16.msra.mxu0 %v1210
        %1745 = vmatpush.bf16.msra.mxu0 %v1208
        %1746 = vmatpush.bf16.msra.mxu0 %v1206
        %1747 = vmatpush.bf16.msra.mxu0 %v1204
        %1748 = vmatpush.bf16.msra.mxu0 %v1202
        %1749 = vmatpush.bf16.msra.mxu0 %v1200
        %1750 = vmatmul.bf16.gmra.mxu0 %v479
        %v1751 = vpop.f32.mrf.mxu0
        %v1752 = vadd.f32 %v1739, %v1751
        %v1753 = vpop.f32.mrf.mxu0
        %1754 = vdwg.mxu0
        %1755 = vmatpush.bf16.msra.mxu0 %v1230
        %1756 = vmatpush.bf16.msra.mxu0 %v1228
        %1757 = vmatpush.bf16.msra.mxu0 %v1226
        %1758 = vmatpush.bf16.msra.mxu0 %v1224
        %1759 = vmatpush.bf16.msra.mxu0 %v1222
        %1760 = vmatpush.bf16.msra.mxu0 %v1220
        %1761 = vmatpush.bf16.msra.mxu0 %v1218
        %1762 = vmatpush.bf16.msra.mxu0 %v1216
        %1763 = vmatmul.bf16.gmra.mxu0 %v482
        %v1764 = vpop.f32.mrf.mxu0
        %v1765 = vadd.f32 %v1752, %v1764
        %v1766 = vpop.f32.mrf.mxu0
        %1767 = vdwg.mxu0
        %1768 = vmatpush.bf16.msra.mxu0 %v1246
        %1769 = vmatpush.bf16.msra.mxu0 %v1244
        %1770 = vmatpush.bf16.msra.mxu0 %v1242
        %1771 = vmatpush.bf16.msra.mxu0 %v1240
        %1772 = vmatpush.bf16.msra.mxu0 %v1238
        %1773 = vmatpush.bf16.msra.mxu0 %v1236
        %1774 = vmatpush.bf16.msra.mxu0 %v1234
        %1775 = vmatpush.bf16.msra.mxu0 %v1232
        %1776 = vmatmul.bf16.gmra.mxu0 %v483
        %v1777 = vpop.f32.mrf.mxu0
        %v1778 = vadd.f32 %v1765, %v1777
        %v1779 = vpop.f32.mrf.mxu0
        %1780 = vdwg.mxu0
        %1781 = vmatpush.bf16.msra.mxu0 %v1262
        %1782 = vmatpush.bf16.msra.mxu0 %v1260
        %1783 = vmatpush.bf16.msra.mxu0 %v1258
        %1784 = vmatpush.bf16.msra.mxu0 %v1256
        %1785 = vmatpush.bf16.msra.mxu0 %v1254
        %1786 = vmatpush.bf16.msra.mxu0 %v1252
        %1787 = vmatpush.bf16.msra.mxu0 %v1250
        %1788 = vmatpush.bf16.msra.mxu0 %v1248
        %1789 = vmatmul.bf16.gmra.mxu0 %v484
        %v1790 = vpop.f32.mrf.mxu0
        %v1791 = vadd.f32 %v1778, %v1790
        %v1792 = vpop.f32.mrf.mxu0
        %1793 = vdwg.mxu0
        %1794 = vmatpush.bf16.msra.mxu0 %v1278
        %1795 = vmatpush.bf16.msra.mxu0 %v1276
        %1796 = vmatpush.bf16.msra.mxu0 %v1274
        %1797 = vmatpush.bf16.msra.mxu0 %v1272
        %1798 = vmatpush.bf16.msra.mxu0 %v1270
        %1799 = vmatpush.bf16.msra.mxu0 %v1268
        %1800 = vmatpush.bf16.msra.mxu0 %v1266
        %1801 = vmatpush.bf16.msra.mxu0 %v1264
        %1802 = vmatmul.bf16.gmra.mxu0 %v485
        %v1803 = vpop.f32.mrf.mxu0
        %v1804 = vadd.f32 %v1791, %v1803
        %v1805 = vpop.f32.mrf.mxu0
        %1806 = vdwg.mxu0
        %1807 = vmatpush.bf16.msra.mxu0 0
        %1808 = vmatpush.bf16.msra.mxu0 0
        %1809 = vmatpush.bf16.msra.mxu0 0
        %1810 = vmatpush.bf16.msra.mxu0 0
        %1811 = vmatpush.bf16.msra.mxu0 0
        %1812 = vmatpush.bf16.msra.mxu0 0
        %1813 = vmatpush.bf16.msra.mxu0 %v1282
        %1814 = vmatpush.bf16.msra.mxu0 %v1280
        %1815 = vmatmul.bf16.gmra.mxu0 %v1480
        %v1816 = vpop.f32.mrf.mxu0
        %v1817 = vadd.f32 %v1804, %v1816
        %v1818 = vpop.f32.mrf.mxu0
        %1819 = vdwg.mxu0
        %v1820 = vmax.f32 %v1648, 0.0
        %v1821 = vmax.f32 %v1817, 0.0
        %v1824 = vrot.slane %v1821, 6
        %vm1825 = vcmask 1041408
        %v1826 = vsel %vm1825, %v1820, %v1824
        %1828 = vst [vmem:[%s262] sm:$0xf] %v1826
        %s1829 = sand.u32 %s121, 1
        %s1830 = scalar_lea.sflag [#allocation4], %s1829
        %s1831 = sand.u32 %s121, 1
        %s1832 = smul.addr %s1831, 4
        %s1833 = scalar_lea.vmem [#allocation8], %s1832
        // Predicated region
        $region45: #{tpu_custom_call.1} parent=31 // pred_check
          %p1834 = pneg %p131
        $region46: #{tpu_custom_call.1} parent=31 // pred_check_branch
          %1836 = sbr.rel (%p1834) target = $region48
        $region47: #{tpu_custom_call.1} parent=31 // pred_region
          %s1837 = smul.u32 2, %s26
          %1839 = vsyncadd %s1830, 0
          %s1840 = smul.addr %s25, 4
          %s1841 = sadd.s32 %s1837, %s1840
          %s1842 = smul.addr %s1841, 2
          %s1843 = scalar_lea.hbm %s3, %s1842
          %s1845 = sshll.u32 %s1833, 4
          %s1846 = int_to_ptr.vmem [resolvable:$true] %s1845
          %s1847 = sshll.u32 %s1843, 4
          %s1848 = int_to_ptr.hbm [resolvable:$true] %s1847
          %1850 = dma.vmem_to_hbm [thread:$0]  %s1846, 64, %s1848, %s1830
        $region48: #{tpu_custom_call.1} parent=31 // pred_fallthru
          _
      $region32: #{tpu_custom_call.1} parent=5 // pred_fallthru
        _
      %p1851 = scmp.le.s32.totalorder 2, %s16
      // Predicated region
      $region49: #{tpu_custom_call.1} parent=5 // pred_check
        %p1852 = pneg %p1851
      $region50: #{tpu_custom_call.1} parent=5 // pred_check_branch
        %1854 = sbr.rel (%p1852) target = $region52
      $region51: #{tpu_custom_call.1} parent=5 // pred_region
        %s1855 = ssub.s32 %s16, 2
        // Predicated region
        $region53: #{tpu_custom_call.1} parent=51 // pred_check
          %p1856 = pneg %p137
        $region54: #{tpu_custom_call.1} parent=51 // pred_check_branch
          %1858 = sbr.rel (%p1856) target = $region56
        $region55: #{tpu_custom_call.1} parent=51 // pred_region
          %s1859 = sand.u32 %s122, 1
          %s1860 = scalar_lea.sflag [#allocation4], %s1859
          %s1861 = sand.u32 %s122, 1
          %s1862 = smul.addr %s1861, 4
          %s1863 = scalar_lea.vmem [#allocation8], %s1862
          %1865 = dma.done %s1860, 64
        $region56: #{tpu_custom_call.1} parent=51 // pred_fallthru
          _
      $region52: #{tpu_custom_call.1} parent=5 // pred_fallthru
        _
    $region6: #{tpu_custom_call.1} parent=1 // loop_footer
      %s20 = sadd.s32 1, %s16
    $region7: #{tpu_custom_call.1} parent=1 // loop_footer_branch
      %15 = sbr.rel target = $region3
    $region8: #{tpu_custom_call.1} parent=1 // loop_exit
      _
    %1866 = vsyncpa [#allocation3], 1
    %s1867 = scalar_lea.sflag [#allocation3], 1
    %1868 = vsyncpa %s1867, 1
    %1869 = vsyncpa [#allocation6], 1
    %s1870 = scalar_lea.sflag [#allocation6], 1
    %1871 = vsyncpa %s1870, 1
    %1872 = vsyncpa [#allocation4], 1
    %s1873 = scalar_lea.sflag [#allocation4], 1
    %1874 = vsyncpa %s1873, 1

</llo_original>
